<compile_context>
chip_gen: v7x
topology: tpu7x:2x2x1
jax: 0.10.0
libtpu: 0.0.40
codegen_flags: <defaults>
</compile_context>

<pallas_src>
import functools

import jax
import jax.numpy as jnp
import numpy as np
from jax import lax
from jax.experimental import pallas as pl
from jax.experimental.pallas import tpu as pltpu

_LANE = 128
_PAD_COORD = 1.0e8  # sentinel coordinate for padded points (far from real data)


def _chamfer_kernel(src_ref, dst_ref, out_ref,
                    fwd_acc, bwd_acc, fwd_min, bwd_min, aug_lhs, aug_rhs,
                    *, tm, tn, m_actual, n_actual, m_padded, n_padded):
    """One (batch, M-tile, N-tile) grid step.

    src_ref : (3, tm)       source tile (xyz on sublanes, points on lanes)
    dst_ref : (3, n_padded) full destination cloud for this batch
    out_ref : (1, 128)      per-batch output row; lane 0 = fwd, lane 1 = bwd
    fwd_acc : (1, 1)        running sum over M tiles of sqrt(min-over-N d2)
    bwd_acc : (1, 1)        running sum over N tiles of sqrt(min-over-M d2)
    fwd_min : (tm, 1)       running min over N tiles (squared) for this M tile
    bwd_min : (1, n_padded) running min over M tiles (squared) per dst point
    aug_lhs : (8, tm)       [-2 s_x, -2 s_y, -2 s_z, ||s||^2, 1, 0, 0, 0]
    aug_rhs : (8, n_padded) [  t_x,    t_y,    t_z,  1, ||t||^2, 0, 0, 0]
    """
    mi, nj = pl.program_id(1), pl.program_id(2)
    n_mi, n_nj = pl.num_programs(1), pl.num_programs(2)

    # ---- per-batch init (first grid step of each batch) ---------------------
    @pl.when(jnp.logical_and(mi == 0, nj == 0))
    def _():
        fwd_acc[...] = jnp.zeros_like(fwd_acc)
        bwd_acc[...] = jnp.zeros_like(bwd_acc)
        bwd_min[...] = jnp.full_like(bwd_min, jnp.inf)
        t = dst_ref[...]                                       # (3, n_padded)
        t2 = jnp.sum(t * t, axis=0, keepdims=True)             # (1, n_padded)
        sub = lax.broadcasted_iota(jnp.int32, (8, n_padded), 0)
        rhs = jnp.where(sub == 0, t[0:1, :], 0.0)
        rhs = jnp.where(sub == 1, t[1:2, :], rhs)
        rhs = jnp.where(sub == 2, t[2:3, :], rhs)
        rhs = jnp.where(sub == 3, 1.0, rhs)
        rhs = jnp.where(sub == 4, t2, rhs)
        aug_rhs[...] = rhs

    # ---- per-(batch, M-tile) init -------------------------------------------
    @pl.when(nj == 0)
    def _():
        fwd_min[...] = jnp.full_like(fwd_min, jnp.inf)
        s = src_ref[...]                                       # (3, tm)
        s2 = jnp.sum(s * s, axis=0, keepdims=True)             # (1, tm)
        sub = lax.broadcasted_iota(jnp.int32, (8, tm), 0)
        lhs = jnp.where(sub == 0, -2.0 * s[0:1, :], 0.0)
        lhs = jnp.where(sub == 1, -2.0 * s[1:2, :], lhs)
        lhs = jnp.where(sub == 2, -2.0 * s[2:3, :], lhs)
        lhs = jnp.where(sub == 3, s2, lhs)
        lhs = jnp.where(sub == 4, 1.0, lhs)
        aug_lhs[...] = lhs

    # ---- pairwise squared distances for this (tm, tn) tile: one MXU op ------
    off = pl.multiple_of(nj * tn, tn)
    d2 = lax.dot_general(
        aug_lhs[...], aug_rhs[:, pl.ds(off, tn)],
        (((0,), (0,)), ((), ())),
        preferred_element_type=jnp.float32,
        precision=lax.Precision.HIGHEST)                       # (tm, tn)

    # ---- running mins (clamp + sqrt deferred to the reduced results) --------
    fwd_min[...] = jnp.minimum(fwd_min[...],
                               jnp.min(d2, axis=1, keepdims=True))
    bwd_min[:, pl.ds(off, tn)] = jnp.minimum(
        bwd_min[:, pl.ds(off, tn)], jnp.min(d2, axis=0, keepdims=True))

    # ---- forward finalize: last N tile of this M tile ------------------------
    @pl.when(nj == n_nj - 1)
    def _():
        vals = jnp.sqrt(jnp.maximum(fwd_min[...], 0.0))        # (tm, 1)
        if m_padded != m_actual:                               # static check
            row = mi * tm + lax.broadcasted_iota(jnp.int32, (tm, 1), 0)
            vals = jnp.where(row < m_actual, vals, 0.0)
        fwd_acc[...] += jnp.sum(vals, axis=0, keepdims=True)

    # ---- backward finalize: last M tile, current N slice ---------------------
    @pl.when(mi == n_mi - 1)
    def _():
        vals = jnp.sqrt(jnp.maximum(bwd_min[:, pl.ds(off, tn)], 0.0))  # (1, tn)
        if n_padded != n_actual:                               # static check
            col = off + lax.broadcasted_iota(jnp.int32, (1, tn), 1)
            vals = jnp.where(col < n_actual, vals, 0.0)
        bwd_acc[...] += jnp.sum(vals, axis=1, keepdims=True)

    # ---- write the per-batch lane-dense partial row once ----------------------
    @pl.when(jnp.logical_and(mi == n_mi - 1, nj == n_nj - 1))
    def _():
        lane = lax.broadcasted_iota(jnp.int32, (1, 128), 1)
        out_ref[...] = jnp.where(lane == 0, fwd_acc[...],
                                 jnp.where(lane == 1, bwd_acc[...], 0.0))


def _round_up(x, m):
    return ((x + m - 1) // m) * m


def _pick_tiles(M, N):
    """Pick (tm, tn) so the (tm, tn) f32 distance tile stays under ~8 MiB —
    conservative for v7x's 64 MiB VMEM once the resident (3,N) dst block,
    the (8,N) augmented rhs and the (1,N) running-min scratch are counted.
    tn prefers multiples of 256 (full MXU output width on v6e/v7x)."""
    budget_elems = (8 * 1024 * 1024) // 4
    tn = min(2048, _round_up(N, _LANE))
    if tn >= 256:
        tn -= tn % 256
    tm = _LANE
    m_cap = _round_up(M, _LANE)
    for cand in (1024, 512, 256, 128):
        if cand <= m_cap and cand * tn <= budget_elems:
            tm = cand
            break
    return tm, tn


@jax.jit
def chamfer_loss_brute_nosigma(pc_src, pc_dst):
    """pc_src: (B, 3, M), pc_dst: (B, 3, N) -> (loss, chamfer_pure, chamfer_weighted)."""
    pc_src = pc_src.astype(jnp.float32)
    pc_dst = pc_dst.astype(jnp.float32)
    B, _, M = pc_src.shape
    N = pc_dst.shape[2]

    tm, tn = _pick_tiles(M, N)
    m_pad = _round_up(M, tm)
    n_pad = _round_up(N, tn)
    # Pad with far-away sentinel points; they never win a min against real
    # points and their own contributions are masked out of the sums by index.
    if m_pad != M:
        pc_src = jnp.pad(pc_src, ((0, 0), (0, 0), (0, m_pad - M)),
                         constant_values=_PAD_COORD)
    if n_pad != N:
        pc_dst = jnp.pad(pc_dst, ((0, 0), (0, 0), (0, n_pad - N)),
                         constant_values=_PAD_COORD)

    grid = (B, m_pad // tm, n_pad // tn)

    kernel = functools.partial(
        _chamfer_kernel, tm=tm, tn=tn,
        m_actual=M, n_actual=N, m_padded=m_pad, n_padded=n_pad)

    cost = pl.CostEstimate(
        flops=int(2 * 8 * B * m_pad * n_pad + 2 * B * m_pad * n_pad),
        transcendentals=int(B * (m_pad + n_pad)),            # sqrt after the mins
        bytes_accessed=int(4 * B * (3 * m_pad + 3 * n_pad + 128)),
    )

    partials = pl.pallas_call(
        kernel,
        out_shape=jax.ShapeDtypeStruct((B, 1, 128), jnp.float32),
        grid_spec=pltpu.PrefetchScalarGridSpec(
            num_scalar_prefetch=0,
            grid=grid,
            in_specs=[
                pl.BlockSpec((None, 3, tm), lambda b, mi, nj: (b, 0, mi)),
                pl.BlockSpec((None, 3, n_pad), lambda b, mi, nj: (b, 0, 0)),
            ],
            out_specs=pl.BlockSpec((None, 1, 128), lambda b, mi, nj: (b, 0, 0)),
            scratch_shapes=[
                pltpu.VMEM((1, 1), jnp.float32),       # forward running sum
                pltpu.VMEM((1, 1), jnp.float32),       # backward running sum
                pltpu.VMEM((tm, 1), jnp.float32),      # forward running min (d^2)
                pltpu.VMEM((1, n_pad), jnp.float32),   # backward running min (d^2)
                pltpu.VMEM((8, tm), jnp.float32),      # augmented lhs (per M tile)
                pltpu.VMEM((8, n_pad), jnp.float32),   # augmented rhs (per batch)
            ],
        ),
        compiler_params=pltpu.CompilerParams(
            dimension_semantics=("parallel", "arbitrary", "arbitrary"),
            vmem_limit_bytes=48 * 1024 * 1024,
        ),
        cost_estimate=cost,
    )(pc_src, pc_dst)

    forward_loss = jnp.sum(partials[:, 0, 0]) / (B * M)   # mean over (B, M)
    backward_loss = jnp.sum(partials[:, 0, 1]) / (B * N)  # mean over (B, N)
    total = forward_loss + backward_loss
    chamfer_pure = total
    chamfer_weighted = chamfer_pure
    return total, chamfer_pure, chamfer_weighted


def _chamfer_reference(pc_src, pc_dst):
    """Pure-JAX reference mirroring the PyTorch forward exactly."""
    src_e = pc_src[:, :, :, None]                   # (B, 3, M, 1)
    dst_e = pc_dst[:, :, None, :]                   # (B, 3, 1, N)
    diff = jnp.linalg.norm(src_e - dst_e, axis=1)   # (B, M, N)
    forward_loss = jnp.min(diff, axis=2).mean()
    backward_loss = jnp.min(diff, axis=1).mean()
    total = forward_loss + backward_loss
    return total, total, total


if __name__ == "__main__":
    key = jax.random.PRNGKey(0)
    k1, k2, k3, k4 = jax.random.split(key, 4)

    # Case 1: lane-aligned M, small N (exercises dst padding + backward mask).
    B, M, N = 2, 128, 64
    pc_src = jax.random.normal(k1, (B, 3, M), dtype=jnp.float32)
    pc_dst = jax.random.normal(k2, (B, 3, N), dtype=jnp.float32)
    out = jax.block_until_ready(chamfer_loss_brute_nosigma(pc_src, pc_dst))
    ref = _chamfer_reference(pc_src, pc_dst)
    for o, r in zip(out, ref):
        np.testing.assert_allclose(np.asarray(o), np.asarray(r),
                                   rtol=1e-4, atol=1e-5)

    # Case 2: unaligned M and N, B == 1 (exercises both padding masks and the
    # N-tiled inner grid axis with a multi-step nj loop).
    B2, M2, N2 = 1, 200, 300
    pc_src2 = jax.random.normal(k3, (B2, 3, M2), dtype=jnp.float32)
    pc_dst2 = jax.random.normal(k4, (B2, 3, N2), dtype=jnp.float32)
    out2 = jax.block_until_ready(chamfer_loss_brute_nosigma(pc_src2, pc_dst2))
    ref2 = _chamfer_reference(pc_src2, pc_dst2)
    for o, r in zip(out2, ref2):
        np.testing.assert_allclose(np.asarray(o), np.asarray(r),
                                   rtol=1e-4, atol=1e-5)

    print("KERNEL_OK")
</pallas_src>

<mosaic_0001>
module attributes {stable_mosaic.version = 11 : i64} {
  func.func @_chamfer_kernel(%arg0: i32, %arg1: i32, %arg2: i32, %arg3: memref<1x3x128xf32, #tpu.memory_space<vmem>>, %arg4: memref<1x3x128xf32, #tpu.memory_space<vmem>>, %arg5: memref<1x1x128xf32, #tpu.memory_space<vmem>>, %arg6: memref<1x1xf32, #tpu.memory_space<vmem>>, %arg7: memref<1x1xf32, #tpu.memory_space<vmem>>, %arg8: memref<128x1xf32, #tpu.memory_space<vmem>>, %arg9: memref<1x128xf32, #tpu.memory_space<vmem>>, %arg10: memref<8x128xf32, #tpu.memory_space<vmem>>, %arg11: memref<8x128xf32, #tpu.memory_space<vmem>>) attributes {dimension_semantics = [#tpu.dimension_semantics<parallel>, #tpu.dimension_semantics<arbitrary>, #tpu.dimension_semantics<arbitrary>], iteration_bounds = array<i64: 2, 1, 1>, scalar_prefetch = 0 : i64, scratch_operands = 6 : i64, tpu.core_type = #tpu.core_type<tc>, window_params = [{transform_indices = @transform_0, window_bounds = array<i64: 1, 3, 128>}, {transform_indices = @transform_1, window_bounds = array<i64: 1, 3, 128>}, {transform_indices = @transform_2, window_bounds = array<i64: 1, 1, 128>}]} {
    %c0_i32 = arith.constant 0 : i32
    %0 = arith.cmpi eq, %arg1, %c0_i32 : i32
    %c0_i32_0 = arith.constant 0 : i32
    %1 = arith.cmpi eq, %arg2, %c0_i32_0 : i32
    %2 = arith.andi %0, %1 : i1
    %3 = arith.extui %2 : i1 to i32
    %c0_i32_1 = arith.constant 0 : i32
    %4 = arith.cmpi ne, %3, %c0_i32_1 : i32
    scf.if %4 {
      %cst_21 = arith.constant 0.000000e+00 : f32
      %37 = vector.broadcast %cst_21 : f32 to vector<1x1xf32>
      %c0_22 = arith.constant 0 : index
      %c0_23 = arith.constant 0 : index
      %38 = vector.load %arg6[%c0_22, %c0_23] : memref<1x1xf32, #tpu.memory_space<vmem>>, vector<1x1xf32>
      tpu.vector_store %arg6[%c0_22, %c0_23], %37 {strides = array<i32>} : memref<1x1xf32, #tpu.memory_space<vmem>>, vector<1x1xf32>,
      %cst_24 = arith.constant 0.000000e+00 : f32
      %39 = vector.broadcast %cst_24 : f32 to vector<1x1xf32>
      %c0_25 = arith.constant 0 : index
      %c0_26 = arith.constant 0 : index
      %40 = vector.load %arg7[%c0_25, %c0_26] : memref<1x1xf32, #tpu.memory_space<vmem>>, vector<1x1xf32>
      tpu.vector_store %arg7[%c0_25, %c0_26], %39 {strides = array<i32>} : memref<1x1xf32, #tpu.memory_space<vmem>>, vector<1x1xf32>,
      %cst_27 = arith.constant 0x7F800000 : f32
      %41 = vector.broadcast %cst_27 : f32 to vector<1x128xf32>
      %c0_28 = arith.constant 0 : index
      %c0_29 = arith.constant 0 : index
      %42 = vector.load %arg9[%c0_28, %c0_29] : memref<1x128xf32, #tpu.memory_space<vmem>>, vector<1x128xf32>
      tpu.vector_store %arg9[%c0_28, %c0_29], %41 {strides = array<i32>} : memref<1x128xf32, #tpu.memory_space<vmem>>, vector<1x128xf32>,
      %c0_30 = arith.constant 0 : index
      %c0_31 = arith.constant 0 : index
      %c0_32 = arith.constant 0 : index
      %43 = vector.load %arg4[%c0_30, %c0_31, %c0_32] : memref<1x3x128xf32, #tpu.memory_space<vmem>>, vector<1x3x128xf32>
      %44 = vector.shape_cast %43 : vector<1x3x128xf32> to vector<3x128xf32>
      %45 = arith.mulf %44, %44 : vector<3x128xf32>
      %cst_33 = arith.constant dense<0.000000e+00> : vector<128xf32>
      %46 = vector.multi_reduction <add>, %45, %cst_33 [0] : vector<3x128xf32> to vector<128xf32>
      %47 = vector.shape_cast %46 : vector<128xf32> to vector<1x128xf32>
      %48 = tpu.iota {dimensions = array<i32: 0>} : vector<8x128xi32>
      %c0_i32_34 = arith.constant 0 : i32
      %49 = vector.broadcast %c0_i32_34 : i32 to vector<8x128xi32>
      %50 = arith.cmpi eq, %48, %49 : vector<8x128xi32>
      %51 = vector.extract_strided_slice %44 {offsets = [0, 0], sizes = [1, 128], strides = [1, 1]} : vector<3x128xf32> to vector<1x128xf32>
      %cst_35 = arith.constant 0.000000e+00 : f32
      %52 = vector.shape_cast %51 : vector<1x128xf32> to vector<1x128xf32>
      %53 = vector.broadcast %52 : vector<1x128xf32> to vector<8x128xf32>
      %54 = vector.broadcast %cst_35 : f32 to vector<8x128xf32>
      %55 = arith.select %50, %53, %54 : vector<8x128xi1>, vector<8x128xf32>
      %c1_i32 = arith.constant 1 : i32
      %56 = vector.broadcast %c1_i32 : i32 to vector<8x128xi32>
      %57 = arith.cmpi eq, %48, %56 : vector<8x128xi32>
      %58 = vector.extract_strided_slice %44 {offsets = [1, 0], sizes = [1, 128], strides = [1, 1]} : vector<3x128xf32> to vector<1x128xf32>
      %59 = vector.shape_cast %58 : vector<1x128xf32> to vector<1x128xf32>
      %60 = vector.broadcast %59 : vector<1x128xf32> to vector<8x128xf32>
      %61 = arith.select %57, %60, %55 : vector<8x128xi1>, vector<8x128xf32>
      %c2_i32 = arith.constant 2 : i32
      %62 = vector.broadcast %c2_i32 : i32 to vector<8x128xi32>
      %63 = arith.cmpi eq, %48, %62 : vector<8x128xi32>
      %64 = vector.extract_strided_slice %44 {offsets = [2, 0], sizes = [1, 128], strides = [1, 1]} : vector<3x128xf32> to vector<1x128xf32>
      %65 = vector.shape_cast %64 : vector<1x128xf32> to vector<1x128xf32>
      %66 = vector.broadcast %65 : vector<1x128xf32> to vector<8x128xf32>
      %67 = arith.select %63, %66, %61 : vector<8x128xi1>, vector<8x128xf32>
      %c3_i32 = arith.constant 3 : i32
      %68 = vector.broadcast %c3_i32 : i32 to vector<8x128xi32>
      %69 = arith.cmpi eq, %48, %68 : vector<8x128xi32>
      %cst_36 = arith.constant 1.000000e+00 : f32
      %70 = vector.broadcast %cst_36 : f32 to vector<8x128xf32>
      %71 = arith.select %69, %70, %67 : vector<8x128xi1>, vector<8x128xf32>
      %c4_i32 = arith.constant 4 : i32
      %72 = vector.broadcast %c4_i32 : i32 to vector<8x128xi32>
      %73 = arith.cmpi eq, %48, %72 : vector<8x128xi32>
      %74 = vector.shape_cast %47 : vector<1x128xf32> to vector<1x128xf32>
      %75 = vector.broadcast %74 : vector<1x128xf32> to vector<8x128xf32>
      %76 = arith.select %73, %75, %71 : vector<8x128xi1>, vector<8x128xf32>
      %c0_37 = arith.constant 0 : index
      %c0_38 = arith.constant 0 : index
      %77 = vector.load %arg11[%c0_37, %c0_38] : memref<8x128xf32, #tpu.memory_space<vmem>>, vector<8x128xf32>
      tpu.vector_store %arg11[%c0_37, %c0_38], %76 {strides = array<i32>} : memref<8x128xf32, #tpu.memory_space<vmem>>, vector<8x128xf32>,
    } else {
    }
    %c0_i32_2 = arith.constant 0 : i32
    %5 = arith.cmpi eq, %arg2, %c0_i32_2 : i32
    %6 = arith.extui %5 : i1 to i32
    %c0_i32_3 = arith.constant 0 : i32
    %7 = arith.cmpi ne, %6, %c0_i32_3 : i32
    scf.if %7 {
      %cst_21 = arith.constant 0x7F800000 : f32
      %37 = vector.broadcast %cst_21 : f32 to vector<128x1xf32>
      %c0_22 = arith.constant 0 : index
      %c0_23 = arith.constant 0 : index
      %38 = vector.load %arg8[%c0_22, %c0_23] : memref<128x1xf32, #tpu.memory_space<vmem>>, vector<128x1xf32>
      tpu.vector_store %arg8[%c0_22, %c0_23], %37 {strides = array<i32>} : memref<128x1xf32, #tpu.memory_space<vmem>>, vector<128x1xf32>,
      %c0_24 = arith.constant 0 : index
      %c0_25 = arith.constant 0 : index
      %c0_26 = arith.constant 0 : index
      %39 = vector.load %arg3[%c0_24, %c0_25, %c0_26] : memref<1x3x128xf32, #tpu.memory_space<vmem>>, vector<1x3x128xf32>
      %40 = vector.shape_cast %39 : vector<1x3x128xf32> to vector<3x128xf32>
      %41 = arith.mulf %40, %40 : vector<3x128xf32>
      %cst_27 = arith.constant dense<0.000000e+00> : vector<128xf32>
      %42 = vector.multi_reduction <add>, %41, %cst_27 [0] : vector<3x128xf32> to vector<128xf32>
      %43 = vector.shape_cast %42 : vector<128xf32> to vector<1x128xf32>
      %44 = tpu.iota {dimensions = array<i32: 0>} : vector<8x128xi32>
      %c0_i32_28 = arith.constant 0 : i32
      %45 = vector.broadcast %c0_i32_28 : i32 to vector<8x128xi32>
      %46 = arith.cmpi eq, %44, %45 : vector<8x128xi32>
      %47 = vector.extract_strided_slice %40 {offsets = [0, 0], sizes = [1, 128], strides = [1, 1]} : vector<3x128xf32> to vector<1x128xf32>
      %cst_29 = arith.constant -2.000000e+00 : f32
      %48 = vector.broadcast %cst_29 : f32 to vector<1x128xf32>
      %49 = arith.mulf %48, %47 : vector<1x128xf32>
      %cst_30 = arith.constant 0.000000e+00 : f32
      %50 = vector.shape_cast %49 : vector<1x128xf32> to vector<1x128xf32>
      %51 = vector.broadcast %50 : vector<1x128xf32> to vector<8x128xf32>
      %52 = vector.broadcast %cst_30 : f32 to vector<8x128xf32>
      %53 = arith.select %46, %51, %52 : vector<8x128xi1>, vector<8x128xf32>
      %c1_i32 = arith.constant 1 : i32
      %54 = vector.broadcast %c1_i32 : i32 to vector<8x128xi32>
      %55 = arith.cmpi eq, %44, %54 : vector<8x128xi32>
      %56 = vector.extract_strided_slice %40 {offsets = [1, 0], sizes = [1, 128], strides = [1, 1]} : vector<3x128xf32> to vector<1x128xf32>
      %cst_31 = arith.constant -2.000000e+00 : f32
      %57 = vector.broadcast %cst_31 : f32 to vector<1x128xf32>
      %58 = arith.mulf %57, %56 : vector<1x128xf32>
      %59 = vector.shape_cast %58 : vector<1x128xf32> to vector<1x128xf32>
      %60 = vector.broadcast %59 : vector<1x128xf32> to vector<8x128xf32>
      %61 = arith.select %55, %60, %53 : vector<8x128xi1>, vector<8x128xf32>
      %c2_i32 = arith.constant 2 : i32
      %62 = vector.broadcast %c2_i32 : i32 to vector<8x128xi32>
      %63 = arith.cmpi eq, %44, %62 : vector<8x128xi32>
      %64 = vector.extract_strided_slice %40 {offsets = [2, 0], sizes = [1, 128], strides = [1, 1]} : vector<3x128xf32> to vector<1x128xf32>
      %cst_32 = arith.constant -2.000000e+00 : f32
      %65 = vector.broadcast %cst_32 : f32 to vector<1x128xf32>
      %66 = arith.mulf %65, %64 : vector<1x128xf32>
      %67 = vector.shape_cast %66 : vector<1x128xf32> to vector<1x128xf32>
      %68 = vector.broadcast %67 : vector<1x128xf32> to vector<8x128xf32>
      %69 = arith.select %63, %68, %61 : vector<8x128xi1>, vector<8x128xf32>
      %c3_i32 = arith.constant 3 : i32
      %70 = vector.broadcast %c3_i32 : i32 to vector<8x128xi32>
      %71 = arith.cmpi eq, %44, %70 : vector<8x128xi32>
      %72 = vector.shape_cast %43 : vector<1x128xf32> to vector<1x128xf32>
      %73 = vector.broadcast %72 : vector<1x128xf32> to vector<8x128xf32>
      %74 = arith.select %71, %73, %69 : vector<8x128xi1>, vector<8x128xf32>
      %c4_i32 = arith.constant 4 : i32
      %75 = vector.broadcast %c4_i32 : i32 to vector<8x128xi32>
      %76 = arith.cmpi eq, %44, %75 : vector<8x128xi32>
      %cst_33 = arith.constant 1.000000e+00 : f32
      %77 = vector.broadcast %cst_33 : f32 to vector<8x128xf32>
      %78 = arith.select %76, %77, %74 : vector<8x128xi1>, vector<8x128xf32>
      %c0_34 = arith.constant 0 : index
      %c0_35 = arith.constant 0 : index
      %79 = vector.load %arg10[%c0_34, %c0_35] : memref<8x128xf32, #tpu.memory_space<vmem>>, vector<8x128xf32>
      tpu.vector_store %arg10[%c0_34, %c0_35], %78 {strides = array<i32>} : memref<8x128xf32, #tpu.memory_space<vmem>>, vector<8x128xf32>,
    } else {
    }
    %c128_i32 = arith.constant 128 : i32
    %8 = arith.muli %arg2, %c128_i32 : i32
    %9 = tpu.assume_multiple %8, 128 : i32
    %c0 = arith.constant 0 : index
    %c0_4 = arith.constant 0 : index
    %10 = vector.load %arg10[%c0, %c0_4] : memref<8x128xf32, #tpu.memory_space<vmem>>, vector<8x128xf32>
    %c0_5 = arith.constant 0 : index
    %11 = arith.index_cast %9 : i32 to index
    %12 = vector.load %arg11[%c0_5, %11] : memref<8x128xf32, #tpu.memory_space<vmem>>, vector<8x128xf32>
    %cst = arith.constant dense<0.000000e+00> : vector<128x128xf32>
    %13 = tpu.matmul %10, %12, %cst {dimension_numbers = #tpu.dot_dimension_numbers<[0], [0], [1], [1], [0, 1, 1, 1], [], []>, precision = #tpu.contract_precision<fp32>} : vector<8x128xf32>, vector<8x128xf32>, vector<128x128xf32> -> vector<128x128xf32>
    %c0_6 = arith.constant 0 : index
    %c0_7 = arith.constant 0 : index
    %14 = vector.load %arg8[%c0_6, %c0_7] : memref<128x1xf32, #tpu.memory_space<vmem>>, vector<128x1xf32>
    %cst_8 = arith.constant dense<0x7F800000> : vector<128xf32>
    %15 = vector.multi_reduction <minimumf>, %13, %cst_8 [1] : vector<128x128xf32> to vector<128xf32>
    %16 = vector.shape_cast %15 : vector<128xf32> to vector<128x1xf32>
    %17 = arith.minimumf %14, %16 : vector<128x1xf32>
    %c0_9 = arith.constant 0 : index
    %c0_10 = arith.constant 0 : index
    %18 = vector.load %arg8[%c0_9, %c0_10] : memref<128x1xf32, #tpu.memory_space<vmem>>, vector<128x1xf32>
    tpu.vector_store %arg8[%c0_9, %c0_10], %17 {strides = array<i32>} : memref<128x1xf32, #tpu.memory_space<vmem>>, vector<128x1xf32>,
    %c0_11 = arith.constant 0 : index
    %19 = arith.index_cast %9 : i32 to index
    %20 = vector.load %arg9[%c0_11, %19] : memref<1x128xf32, #tpu.memory_space<vmem>>, vector<1x128xf32>
    %cst_12 = arith.constant dense<0x7F800000> : vector<128xf32>
    %21 = vector.multi_reduction <minimumf>, %13, %cst_12 [0] : vector<128x128xf32> to vector<128xf32>
    %22 = vector.shape_cast %21 : vector<128xf32> to vector<1x128xf32>
    %23 = arith.minimumf %20, %22 : vector<1x128xf32>
    %c0_13 = arith.constant 0 : index
    %24 = arith.index_cast %9 : i32 to index
    %25 = vector.load %arg9[%c0_13, %24] : memref<1x128xf32, #tpu.memory_space<vmem>>, vector<1x128xf32>
    tpu.vector_store %arg9[%c0_13, %24], %23 {strides = array<i32>} : memref<1x128xf32, #tpu.memory_space<vmem>>, vector<1x128xf32>,
    %c0_i32_14 = arith.constant 0 : i32
    %26 = arith.cmpi eq, %arg2, %c0_i32_14 : i32
    %27 = arith.extui %26 : i1 to i32
    %c0_i32_15 = arith.constant 0 : i32
    %28 = arith.cmpi ne, %27, %c0_i32_15 : i32
    scf.if %28 {
      %c0_21 = arith.constant 0 : index
      %c0_22 = arith.constant 0 : index
      %37 = vector.load %arg8[%c0_21, %c0_22] : memref<128x1xf32, #tpu.memory_space<vmem>>, vector<128x1xf32>
      %cst_23 = arith.constant 0.000000e+00 : f32
      %38 = vector.broadcast %cst_23 : f32 to vector<128x1xf32>
      %39 = arith.maximumf %37, %38 : vector<128x1xf32>
      %40 = math.sqrt %39 : vector<128x1xf32>
      %c0_24 = arith.constant 0 : index
      %c0_25 = arith.constant 0 : index
      %41 = vector.load %arg6[%c0_24, %c0_25] : memref<1x1xf32, #tpu.memory_space<vmem>>, vector<1x1xf32>
      %cst_26 = arith.constant dense<0.000000e+00> : vector<1xf32>
      %42 = vector.multi_reduction <add>, %40, %cst_26 [0] : vector<128x1xf32> to vector<1xf32>
      %43 = vector.shape_cast %42 : vector<1xf32> to vector<1x1xf32>
      %44 = arith.addf %41, %43 : vector<1x1xf32>
      %c0_27 = arith.constant 0 : index
      %c0_28 = arith.constant 0 : index
      %45 = vector.load %arg6[%c0_27, %c0_28] : memref<1x1xf32, #tpu.memory_space<vmem>>, vector<1x1xf32>
      tpu.vector_store %arg6[%c0_27, %c0_28], %44 {strides = array<i32>} : memref<1x1xf32, #tpu.memory_space<vmem>>, vector<1x1xf32>,
    } else {
    }
    %c0_i32_16 = arith.constant 0 : i32
    %29 = arith.cmpi eq, %arg1, %c0_i32_16 : i32
    %30 = arith.extui %29 : i1 to i32
    %c0_i32_17 = arith.constant 0 : i32
    %31 = arith.cmpi ne, %30, %c0_i32_17 : i32
    scf.if %31 {
      %c0_21 = arith.constant 0 : index
      %37 = arith.index_cast %9 : i32 to index
      %38 = vector.load %arg9[%c0_21, %37] : memref<1x128xf32, #tpu.memory_space<vmem>>, vector<1x128xf32>
      %cst_22 = arith.constant 0.000000e+00 : f32
      %39 = vector.broadcast %cst_22 : f32 to vector<1x128xf32>
      %40 = arith.maximumf %38, %39 : vector<1x128xf32>
      %41 = math.sqrt %40 : vector<1x128xf32>
      %42 = tpu.iota {dimensions = array<i32: 1>} : vector<1x128xi32>
      %43 = vector.broadcast %9 : i32 to vector<1x128xi32>
      %44 = arith.addi %43, %42 : vector<1x128xi32>
      %c64_i32 = arith.constant 64 : i32
      %45 = vector.broadcast %c64_i32 : i32 to vector<1x128xi32>
      %46 = arith.cmpi slt, %44, %45 : vector<1x128xi32>
      %cst_23 = arith.constant 0.000000e+00 : f32
      %47 = vector.broadcast %cst_23 : f32 to vector<1x128xf32>
      %48 = arith.select %46, %41, %47 : vector<1x128xi1>, vector<1x128xf32>
      %c0_24 = arith.constant 0 : index
      %c0_25 = arith.constant 0 : index
      %49 = vector.load %arg7[%c0_24, %c0_25] : memref<1x1xf32, #tpu.memory_space<vmem>>, vector<1x1xf32>
      %cst_26 = arith.constant dense<0.000000e+00> : vector<1xf32>
      %50 = vector.multi_reduction <add>, %48, %cst_26 [1] : vector<1x128xf32> to vector<1xf32>
      %51 = vector.shape_cast %50 : vector<1xf32> to vector<1x1xf32>
      %52 = arith.addf %49, %51 : vector<1x1xf32>
      %c0_27 = arith.constant 0 : index
      %c0_28 = arith.constant 0 : index
      %53 = vector.load %arg7[%c0_27, %c0_28] : memref<1x1xf32, #tpu.memory_space<vmem>>, vector<1x1xf32>
      tpu.vector_store %arg7[%c0_27, %c0_28], %52 {strides = array<i32>} : memref<1x1xf32, #tpu.memory_space<vmem>>, vector<1x1xf32>,
    } else {
    }
    %c0_i32_18 = arith.constant 0 : i32
    %32 = arith.cmpi eq, %arg1, %c0_i32_18 : i32
    %c0_i32_19 = arith.constant 0 : i32
    %33 = arith.cmpi eq, %arg2, %c0_i32_19 : i32
    %34 = arith.andi %32, %33 : i1
    %35 = arith.extui %34 : i1 to i32
    %c0_i32_20 = arith.constant 0 : i32
    %36 = arith.cmpi ne, %35, %c0_i32_20 : i32
    scf.if %36 {
      %37 = tpu.iota {dimensions = array<i32: 1>} : vector<1x128xi32>
      %c0_i32_21 = arith.constant 0 : i32
      %38 = vector.broadcast %c0_i32_21 : i32 to vector<1x128xi32>
      %39 = arith.cmpi eq, %37, %38 : vector<1x128xi32>
      %c0_22 = arith.constant 0 : index
      %c0_23 = arith.constant 0 : index
      %40 = vector.load %arg6[%c0_22, %c0_23] : memref<1x1xf32, #tpu.memory_space<vmem>>, vector<1x1xf32>
      %c1_i32 = arith.constant 1 : i32
      %41 = vector.broadcast %c1_i32 : i32 to vector<1x128xi32>
      %42 = arith.cmpi eq, %37, %41 : vector<1x128xi32>
      %c0_24 = arith.constant 0 : index
      %c0_25 = arith.constant 0 : index
      %43 = vector.load %arg7[%c0_24, %c0_25] : memref<1x1xf32, #tpu.memory_space<vmem>>, vector<1x1xf32>
      %cst_26 = arith.constant 0.000000e+00 : f32
      %44 = vector.shape_cast %43 : vector<1x1xf32> to vector<1x1xf32>
      %45 = vector.broadcast %44 : vector<1x1xf32> to vector<1x128xf32>
      %46 = vector.broadcast %cst_26 : f32 to vector<1x128xf32>
      %47 = arith.select %42, %45, %46 : vector<1x128xi1>, vector<1x128xf32>
      %48 = vector.shape_cast %40 : vector<1x1xf32> to vector<1x1xf32>
      %49 = vector.broadcast %48 : vector<1x1xf32> to vector<1x128xf32>
      %50 = arith.select %39, %49, %47 : vector<1x128xi1>, vector<1x128xf32>
      %c0_27 = arith.constant 0 : index
      %c0_28 = arith.constant 0 : index
      %c0_29 = arith.constant 0 : index
      %51 = vector.load %arg5[%c0_27, %c0_28, %c0_29] : memref<1x1x128xf32, #tpu.memory_space<vmem>>, vector<1x1x128xf32>
      %52 = vector.shape_cast %51 : vector<1x1x128xf32> to vector<1x128xf32>
      %53 = vector.shape_cast %50 : vector<1x128xf32> to vector<1x1x128xf32>
      tpu.vector_store %arg5[%c0_27, %c0_28, %c0_29], %53 {strides = array<i32>} : memref<1x1x128xf32, #tpu.memory_space<vmem>>, vector<1x1x128xf32>,
    } else {
    }
    return
  }
  func.func @transform_0(%arg0: i32, %arg1: i32, %arg2: i32) -> (i32, i32, i32) {
    %c0_i32 = arith.constant 0 : i32
    %c0_i32_0 = arith.constant 0 : i32
    return %arg0, %c0_i32, %arg1 : i32, i32, i32
  }
  func.func @transform_1(%arg0: i32, %arg1: i32, %arg2: i32) -> (i32, i32, i32) {
    %c0_i32 = arith.constant 0 : i32
    %c0_i32_0 = arith.constant 0 : i32
    %c0_i32_1 = arith.constant 0 : i32
    return %arg0, %c0_i32, %c0_i32_0 : i32, i32, i32
  }
  func.func @transform_2(%arg0: i32, %arg1: i32, %arg2: i32) -> (i32, i32, i32) {
    %c0_i32 = arith.constant 0 : i32
    %c0_i32_0 = arith.constant 0 : i32
    %c0_i32_1 = arith.constant 0 : i32
    return %arg0, %c0_i32, %c0_i32_0 : i32, i32, i32
  }
}

</mosaic_0001>

<llo_original>
// kernel: chamfer_loss_brute_nosigma.1
$region0: #{chamfer_loss_brute_nosigma.1}
  #allocation0 [shape = 'u32[]', space=smem, size = 0x4, offset = 0x4, fixed_abs, tag = 'smem constant byte address 0x4 - core index']
  #allocation1 [shape = 'u32[144,128]{1,0:T(1,128)}', space=vmem, size = 0x12000, scoped, tag = 'internal scratch']
  #allocation2 [shape = 'f32[1,1]{1,0:T(1,128)}', space=vmem, size = 0x200, scoped, tag = 'scratch operand']
  #allocation3 [shape = 'f32[1,1]{1,0:T(1,128)}', space=vmem, size = 0x200, scoped, tag = 'scratch operand']
  #allocation4 [shape = 'f32[128,1]{1,0:T(8,128)}', space=vmem, size = 0x10000, scoped, tag = 'scratch operand']
  #allocation5 [shape = 'f32[1,128]{1,0:T(1,128)}', space=vmem, size = 0x200, scoped, tag = 'scratch operand']
  #allocation6 [shape = 'f32[8,128]{1,0:T(8,128)}', space=vmem, size = 0x1000, scoped, tag = 'scratch operand']
  #allocation7 [shape = 'f32[8,128]{1,0:T(8,128)}', space=vmem, size = 0x1000, scoped, tag = 'scratch operand']
  %s0 = inlined_call_operand.vmem [shape: f32[2,3,128], index: 0, kind: input, shape index: {}]
  %s1 = inlined_call_operand.vmem [shape: f32[2,3,128], index: 1, kind: input, shape index: {}]
  %s2 = inlined_call_operand.vmem [shape: f32[2,1,128], index: 2, kind: output, shape index: {}]
  %s3 = sld [smem:[#allocation0]]
  $region61: #{chamfer_loss_brute_nosigma.1} parent=0
    _
  %s5 = ssub.s32 1, %s3
  %s6 = scalar_select 0, %s5, %s3
  loop: start=0, step=1, limit=4
  $region2: #{chamfer_loss_brute_nosigma.1} parent=0 // loop_pre_header
    _
  $region3: #{chamfer_loss_brute_nosigma.1} parent=0 // loop_header
    %s8 = sphi 0, %s12
    %p9 = scmp.ge.s32.totalorder %s8, 4
    %s15 = sphi 0, %s34
    %s16 = sphi 0, %s30
    %s17 = sphi 0, %s26
    %s18 = sphi 0, %s15
    %s19 = sphi 0, %s16
    %s20 = sphi 0, %s17
    %s21 = sphi 0, %s18
    %s22 = sphi 0, %s19
    %s23 = sphi 0, %s20
    %s39 = sphi 0, %s41
    %s42 = sphi 0, %s39
    %s43 = sphi 0, %s42
    %s59 = sphi 0, %s43
    %s65 = sphi 0, %s67
    %s68 = sphi 0, %s65
    %s69 = sphi 0, %s68
    %s85 = sphi 0, %s69
    %s91 = sphi 0, %s93
    %s94 = sphi 0, %s91
    %s95 = sphi 0, %s94
    %s111 = sphi 0, %s95
  $region4: #{chamfer_loss_brute_nosigma.1} parent=0 // loop_header_branch
    %11 = sbr.rel (%p9) target = $region8
  $region5: #{chamfer_loss_brute_nosigma.1} parent=0 // loop_body
    %s13 = ssub.s32 %s8, 1
    %s14 = ssub.s32 %s8, 2
    %s24 = sadd.s32 1, %s17
    %p25 = scmp.ge.s32.totalorder %s24, 1
    %s26 = scalar_select %p25, 0, %s24
    %s27 = sadd.s32 1, %s16
    %s28 = scalar_select %p25, %s27, %s16
    %p29 = scmp.ge.s32.totalorder %s28, 1
    %s30 = scalar_select %p29, 0, %s28
    %s31 = sadd.s32 1, %s15
    %s32 = scalar_select %p29, %s31, %s15
    %p33 = scmp.ge.s32.totalorder %s32, 2
    %s34 = scalar_select %p33, 0, %s32
    %s35 = ssub.s32 %s15, %s34
    %s36 = ssub.s32 %s16, %s30
    %s37 = sor.u32 %s35, %s36
    %p38 = scmp.eq.s32.totalorder %s37, 0
    %s40 = sadd.s32 %s39, 1
    %s41 = scalar_select %p38, %s39, %s40
    %p44 = pneg %p38
    %p45 = scmp.eq.s32.totalorder %s8, 1
    %p46 = por %p44, %p45
    %p47 = scmp.ne.s32.totalorder %s39, %s42
    %p48 = scmp.eq.s32.totalorder %s8, 0
    %p49 = por %p47, %p48
    %p50 = scmp.ne.s32.totalorder %s39, %s42
    %p51 = scmp.eq.s32.totalorder %s13, 1
    %p52 = por %p50, %p51
    %p53 = scmp.ne.s32.totalorder %s42, %s43
    %p54 = scmp.eq.s32.totalorder %s13, 0
    %p55 = por %p53, %p54
    %p56 = scmp.ne.s32.totalorder %s42, %s43
    %p57 = scmp.eq.s32.totalorder %s14, 1
    %p58 = por %p56, %p57
    %p60 = scmp.ne.s32.totalorder %s43, %s59
    %p61 = scmp.eq.s32.totalorder %s14, 0
    %p62 = por %p60, %p61
    %s63 = ssub.s32 %s15, %s34
    %p64 = scmp.eq.s32.totalorder %s63, 0
    %s66 = sadd.s32 %s65, 1
    %s67 = scalar_select %p64, %s65, %s66
    %p70 = pneg %p64
    %p71 = scmp.eq.s32.totalorder %s8, 1
    %p72 = por %p70, %p71
    %p73 = scmp.ne.s32.totalorder %s65, %s68
    %p74 = scmp.eq.s32.totalorder %s8, 0
    %p75 = por %p73, %p74
    %p76 = scmp.ne.s32.totalorder %s65, %s68
    %p77 = scmp.eq.s32.totalorder %s13, 1
    %p78 = por %p76, %p77
    %p79 = scmp.ne.s32.totalorder %s68, %s69
    %p80 = scmp.eq.s32.totalorder %s13, 0
    %p81 = por %p79, %p80
    %p82 = scmp.ne.s32.totalorder %s68, %s69
    %p83 = scmp.eq.s32.totalorder %s14, 1
    %p84 = por %p82, %p83
    %p86 = scmp.ne.s32.totalorder %s69, %s85
    %p87 = scmp.eq.s32.totalorder %s14, 0
    %p88 = por %p86, %p87
    %s89 = ssub.s32 %s15, %s34
    %p90 = scmp.eq.s32.totalorder %s89, 0
    %s92 = sadd.s32 %s91, 1
    %s93 = scalar_select %p90, %s91, %s92
    %p96 = pneg %p90
    %p97 = scmp.eq.s32.totalorder %s8, 1
    %p98 = por %p96, %p97
    %p99 = scmp.ne.s32.totalorder %s91, %s94
    %p100 = scmp.eq.s32.totalorder %s8, 0
    %p101 = por %p99, %p100
    %p102 = scmp.ne.s32.totalorder %s91, %s94
    %p103 = scmp.eq.s32.totalorder %s13, 1
    %p104 = por %p102, %p103
    %p105 = scmp.ne.s32.totalorder %s94, %s95
    %p106 = scmp.eq.s32.totalorder %s13, 0
    %p107 = por %p105, %p106
    %p108 = scmp.ne.s32.totalorder %s94, %s95
    %p109 = scmp.eq.s32.totalorder %s14, 1
    %p110 = por %p108, %p109
    %p112 = scmp.ne.s32.totalorder %s95, %s111
    %p113 = scmp.eq.s32.totalorder %s14, 0
    %p114 = por %p112, %p113
    %p115 = scmp.le.s32.totalorder 1, %s8
    %p116 = scmp.lt.s32.totalorder %s8, 3
    %p117 = pnand %p115, %p116
    %p118 = pneg %p117
    // Predicated region
    $region9: #{chamfer_loss_brute_nosigma.1} parent=5 // pred_check
      _
    $region10: #{chamfer_loss_brute_nosigma.1} parent=5 // pred_check_branch
      %120 = sbr.rel (%p117) target = $region12
    $region11: #{chamfer_loss_brute_nosigma.1} parent=5 // pred_region
      %s121 = ssub.s32 %s8, 1
    $region12: #{chamfer_loss_brute_nosigma.1} parent=5 // pred_fallthru
      _
    %p122 = scmp.lt.s32.totalorder %s8, 2
    // Predicated region
    $region13: #{chamfer_loss_brute_nosigma.1} parent=5 // pred_check
      %p123 = pneg %p122
    $region14: #{chamfer_loss_brute_nosigma.1} parent=5 // pred_check_branch
      %125 = sbr.rel (%p123) target = $region16
    $region15: #{chamfer_loss_brute_nosigma.1} parent=5 // pred_region
      // Predicated region
      $region17: #{chamfer_loss_brute_nosigma.1} parent=15 // pred_check
        %p126 = pneg %p49
      $region18: #{chamfer_loss_brute_nosigma.1} parent=15 // pred_check_branch
        %128 = sbr.rel (%p126) target = $region20
      $region19: #{chamfer_loss_brute_nosigma.1} parent=15 // pred_region
        %p129 = scmp.lt.s32.totalorder %s15, 1
        %s130 = scalar_select %p129, %s15, 1
        %p131 = scmp.lt.s32.totalorder %s16, 0
        %s132 = scalar_select %p131, %s16, 0
        %s133 = sadd.s32 %s132, %s130
        %s134 = smul.addr %s133, 4
        %s135 = scalar_lea.vmem %s0, %s134
      $region20: #{chamfer_loss_brute_nosigma.1} parent=15 // pred_fallthru
        _
      // Predicated region
      $region21: #{chamfer_loss_brute_nosigma.1} parent=15 // pred_check
        %p136 = pneg %p75
      $region22: #{chamfer_loss_brute_nosigma.1} parent=15 // pred_check_branch
        %138 = sbr.rel (%p136) target = $region24
      $region23: #{chamfer_loss_brute_nosigma.1} parent=15 // pred_region
        %p139 = scmp.lt.s32.totalorder %s15, 1
        %s140 = scalar_select %p139, %s15, 1
        %s141 = smul.addr %s140, 4
        %s142 = scalar_lea.vmem %s1, %s141
      $region24: #{chamfer_loss_brute_nosigma.1} parent=15 // pred_fallthru
        _
    $region16: #{chamfer_loss_brute_nosigma.1} parent=5 // pred_fallthru
      _
    %p143 = scmp.le.s32.totalorder 1, %s8
    %p144 = scmp.lt.s32.totalorder %s8, 3
    %p145 = pnand %p143, %p144
    %p146 = pneg %p145
    // Predicated region
    $region25: #{chamfer_loss_brute_nosigma.1} parent=5 // pred_check
      _
    $region26: #{chamfer_loss_brute_nosigma.1} parent=5 // pred_check_branch
      %148 = sbr.rel (%p145) target = $region28
    $region27: #{chamfer_loss_brute_nosigma.1} parent=5 // pred_region
      %s149 = ssub.s32 %s8, 1
      %p150 = scmp.lt.s32.totalorder %s18, 1
      %s151 = scalar_select %p150, %s18, 1
      %p152 = scmp.lt.s32.totalorder %s19, 0
      %s153 = scalar_select %p152, %s19, 0
      %s154 = sadd.s32 %s153, %s151
      %s155 = smul.addr %s154, 4
      %s156 = scalar_lea.vmem %s0, %s155
      %p157 = pneg %p55
      %p158 = pneg %p52
      %p159 = scmp.lt.s32.totalorder %s18, 1
      %s160 = scalar_select %p159, %s18, 1
      %s161 = smul.addr %s160, 4
      %s162 = scalar_lea.vmem %s1, %s161
      %p163 = pneg %p81
      %p164 = pneg %p78
      %p165 = pneg %p107
      %p166 = pneg %p104
      %p167 = scmp.lt.s32.totalorder %s18, 1
      %s168 = scalar_select %p167, %s18, 1
      %s169 = scalar_lea.vmem %s2, %s168
      %p170 = scmp.lt.s32.totalorder %s18, 1
      %s171 = scalar_select %p170, %s18, 1
      %p172 = scmp.lt.s32.totalorder %s19, 0
      %s173 = scalar_select %p172, %s19, 0
      %s174 = sadd.s32 %s173, %s171
      %s175 = smul.addr %s174, 4
      %s176 = scalar_lea.vmem %s0, %s175
      %p177 = scmp.lt.s32.totalorder %s18, 1
      %s178 = scalar_select %p177, %s18, 1
      %s179 = smul.addr %s178, 4
      %s180 = scalar_lea.vmem %s1, %s179
      %p181 = scmp.lt.s32.totalorder %s18, 1
      %s182 = scalar_select %p181, %s18, 1
      %s183 = scalar_lea.vmem %s2, %s182
      %p184 = scmp.eq.s32.totalorder %s19, 0
      %p185 = scmp.eq.s32.totalorder %s20, 0
      %p186 = pnand %p184, %p185
      %p187 = pneg %p186
      // Predicated region
      $region29: #{chamfer_loss_brute_nosigma.1} parent=27 // pred_check
        _
      $region30: #{chamfer_loss_brute_nosigma.1} parent=27 // pred_check_branch
        %189 = sbr.rel (%p186) target = $region32
      $region31: #{chamfer_loss_brute_nosigma.1} parent=27 // pred_region
        %vm190 = vcmask 0
        %191 = vst.msk [vmem:[#allocation2] sm:$0x1] %vm190, 0.0
        %192 = vst.msk [vmem:[#allocation3] sm:$0x1] %vm190, 0.0
        %193 = vst [vmem:[#allocation5] sm:$0x1] inf
        %v194 = vld [vmem:[%s180] sm:$0x7]
        %v195 = vmul.f32 %v194, %v194
        %vm196 = vcmask 1042432
        %v197 = vsel %vm196, %v195, 0.0
        %v198 = vrot.slane %v197, 4
        %v199 = vadd.f32 %v197, %v198
        %v200 = vrot.slane %v199, 2
        %v201 = vadd.f32 %v199, %v200
        %v202 = vrot.slane %v201, 1
        %v203 = vadd.f32 %v201, %v202
        %v204 = vlaneseq
        %v205 = vshrl.u32 %v204, 7
        %vm206 = vcmp.eq.s32.totalorder %v205, 0
        %v207 = vlaneseq
        %v208 = vshrl.u32 %v207, 7
        %v209 = vsub.s32 0, %v208
        %v210 = vrot.slane %v194, %v209
        %v211 = vsel %vm206, %v210, 0.0
        %vm212 = vcmp.eq.s32.totalorder %v205, 1
        %v213 = vlaneseq
        %v214 = vshrl.u32 %v213, 7
        %v215 = vsub.s32 1, %v214
        %v216 = vrot.slane %v194, %v215
        %v217 = vsel %vm212, %v216, %v211
        %vm218 = vcmp.eq.s32.totalorder %v205, 2
        %v219 = vlaneseq
        %v220 = vshrl.u32 %v219, 7
        %v221 = vsub.s32 2, %v220
        %v222 = vrot.slane %v194, %v221
        %v223 = vsel %vm218, %v222, %v217
        %vm224 = vcmp.eq.s32.totalorder %v205, 3
        %v225 = vsel %vm224, 1.0, %v223
        %vm226 = vcmp.eq.s32.totalorder %v205, 4
        %v227 = vsel %vm226, %v203, %v225
        %228 = vst [vmem:[#allocation7] sm:$0xff] %v227
      $region32: #{chamfer_loss_brute_nosigma.1} parent=27 // pred_fallthru
        _
      // Predicated region
      $region33: #{chamfer_loss_brute_nosigma.1} parent=27 // pred_check
        %p229 = pneg %p185
      $region34: #{chamfer_loss_brute_nosigma.1} parent=27 // pred_check_branch
        %231 = sbr.rel (%p229) target = $region36
      $region35: #{chamfer_loss_brute_nosigma.1} parent=27 // pred_region
        %vm232 = vcmask 7168
        %233 = vst.msk [vmem:[#allocation4] sm:$0xff] %vm232, inf
        %234 = vst.msk [vmem:[#allocation4 + $0x8] sm:$0xff] %vm232, inf
        %235 = vst.msk [vmem:[#allocation4 + $0x10] sm:$0xff] %vm232, inf
        %236 = vst.msk [vmem:[#allocation4 + $0x18] sm:$0xff] %vm232, inf
        %237 = vst.msk [vmem:[#allocation4 + $0x20] sm:$0xff] %vm232, inf
        %238 = vst.msk [vmem:[#allocation4 + $0x28] sm:$0xff] %vm232, inf
        %239 = vst.msk [vmem:[#allocation4 + $0x30] sm:$0xff] %vm232, inf
        %240 = vst.msk [vmem:[#allocation4 + $0x38] sm:$0xff] %vm232, inf
        %241 = vst.msk [vmem:[#allocation4 + $0x40] sm:$0xff] %vm232, inf
        %242 = vst.msk [vmem:[#allocation4 + $0x48] sm:$0xff] %vm232, inf
        %243 = vst.msk [vmem:[#allocation4 + $0x50] sm:$0xff] %vm232, inf
        %244 = vst.msk [vmem:[#allocation4 + $0x58] sm:$0xff] %vm232, inf
        %245 = vst.msk [vmem:[#allocation4 + $0x60] sm:$0xff] %vm232, inf
        %246 = vst.msk [vmem:[#allocation4 + $0x68] sm:$0xff] %vm232, inf
        %247 = vst.msk [vmem:[#allocation4 + $0x70] sm:$0xff] %vm232, inf
        %248 = vst.msk [vmem:[#allocation4 + $0x78] sm:$0xff] %vm232, inf
        %v249 = vld [vmem:[%s176] sm:$0x7]
        %v250 = vmul.f32 %v249, %v249
        %vm251 = vcmask 1042432
        %v252 = vsel %vm251, %v250, 0.0
        %v253 = vrot.slane %v252, 4
        %v254 = vadd.f32 %v252, %v253
        %v255 = vrot.slane %v254, 2
        %v256 = vadd.f32 %v254, %v255
        %v257 = vrot.slane %v256, 1
        %v258 = vadd.f32 %v256, %v257
        %v259 = vlaneseq
        %v260 = vshrl.u32 %v259, 7
        %vm261 = vcmp.eq.s32.totalorder %v260, 0
        %v262 = vmul.f32 %v249, -2.0
        %v263 = vlaneseq
        %v264 = vshrl.u32 %v263, 7
        %v265 = vsub.s32 0, %v264
        %v266 = vrot.slane %v262, %v265
        %v267 = vsel %vm261, %v266, 0.0
        %vm268 = vcmp.eq.s32.totalorder %v260, 1
        %v269 = vlaneseq
        %v270 = vshrl.u32 %v269, 7
        %v271 = vsub.s32 1, %v270
        %v272 = vrot.slane %v262, %v271
        %v273 = vsel %vm268, %v272, %v267
        %vm274 = vcmp.eq.s32.totalorder %v260, 2
        %v275 = vlaneseq
        %v276 = vshrl.u32 %v275, 7
        %v277 = vsub.s32 2, %v276
        %v278 = vrot.slane %v262, %v277
        %v279 = vsel %vm274, %v278, %v273
        %vm280 = vcmp.eq.s32.totalorder %v260, 3
        %v281 = vsel %vm280, %v258, %v279
        %vm282 = vcmp.eq.s32.totalorder %v260, 4
        %v283 = vsel %vm282, 1.0, %v281
        %284 = vst [vmem:[#allocation6] sm:$0xff] %v283
      $region36: #{chamfer_loss_brute_nosigma.1} parent=27 // pred_fallthru
        _
      %s285 = smul.u32 %s20, 128
      %v286 = vld [vmem:[#allocation6] sm:$0xff]
      %s287 = sshra.s32 %s285, 7
      %s288 = sand.u32 %s285, 127
      %s289 = scalar_lea.vmem [#allocation7], %s287
      %v290 = vld [vmem:[%s289] sm:$0xff]
      %291 = vxpose.xlu0.b32.start [1/16] %v286, 128
      %292 = vxpose.xlu0.b32.cont [2/16] 0.0, 128
      %293 = vxpose.xlu0.b32.cont [3/16] 0.0, 128
      %294 = vxpose.xlu0.b32.cont [4/16] 0.0, 128
      %295 = vxpose.xlu0.b32.cont [5/16] 0.0, 128
      %296 = vxpose.xlu0.b32.cont [6/16] 0.0, 128
      %297 = vxpose.xlu0.b32.cont [7/16] 0.0, 128
      %298 = vxpose.xlu0.b32.cont [8/16] 0.0, 128
      %299 = vxpose.xlu0.b32.cont [9/16] 0.0, 128
      %300 = vxpose.xlu0.b32.cont [10/16] 0.0, 128
      %301 = vxpose.xlu0.b32.cont [11/16] 0.0, 128
      %302 = vxpose.xlu0.b32.cont [12/16] 0.0, 128
      %303 = vxpose.xlu0.b32.cont [13/16] 0.0, 128
      %304 = vxpose.xlu0.b32.cont [14/16] 0.0, 128
      %305 = vxpose.xlu0.b32.cont [15/16] 0.0, 128
      %306 = vxpose.xlu0.b32.end [16/16] 0.0, 128
      %v307 = vpop.trf.xlu0
      %v308 = vpop.trf.xlu0
      %v309 = vpop.trf.xlu0
      %v310 = vpop.trf.xlu0
      %v311 = vpop.trf.xlu0
      %v312 = vpop.trf.xlu0
      %v313 = vpop.trf.xlu0
      %v314 = vpop.trf.xlu0
      %v315 = vpop.trf.xlu0
      %v316 = vpop.trf.xlu0
      %v317 = vpop.trf.xlu0
      %v318 = vpop.trf.xlu0
      %v319 = vpop.trf.xlu0
      %v320 = vpop.trf.xlu0
      %v321 = vpop.trf.xlu0
      %v322 = vpop.trf.xlu0
      %vm323 = vcmask 64512
      %v325 = vsel %vm323, %v307, 0
      %v328 = vsel %vm323, %v308, 0
      %v331 = vsel %vm323, %v309, 0
      %v334 = vsel %vm323, %v310, 0
      %v337 = vsel %vm323, %v311, 0
      %v340 = vsel %vm323, %v312, 0
      %v343 = vsel %vm323, %v313, 0
      %v346 = vsel %vm323, %v314, 0
      %v349 = vsel %vm323, %v315, 0
      %v352 = vsel %vm323, %v316, 0
      %v355 = vsel %vm323, %v317, 0
      %v358 = vsel %vm323, %v318, 0
      %v361 = vsel %vm323, %v319, 0
      %v364 = vsel %vm323, %v320, 0
      %v367 = vsel %vm323, %v321, 0
      %v370 = vsel %vm323, %v322, 0
      %372 = vmatprep.subr.mxu0 0.0
      %v373 = vand.u32 %v290, 4294901760
      %374 = vmatpush1.msra.mxu0 %v373
      %375 = vmatprep.subr.mxu0 0.0
      %376 = vmatpush1.msra.mxu0 0.0
      %377 = vmatprep.subr.mxu0 0.0
      %378 = vmatpush1.msra.mxu0 0.0
      %379 = vmatprep.subr.mxu0 0.0
      %380 = vmatpush1.msra.mxu0 0.0
      %381 = vmatprep.subr.mxu0 0.0
      %382 = vmatpush1.msra.mxu0 0.0
      %383 = vmatprep.subr.mxu0 0.0
      %384 = vmatpush1.msra.mxu0 0.0
      %385 = vmatprep.subr.mxu0 0.0
      %386 = vmatpush1.msra.mxu0 0.0
      %387 = vmatprep.subr.mxu0 0.0
      %388 = vmatpush1.msra.mxu0 0.0
      %389 = vmatprep.subr.mxu0 0.0
      %390 = vmatpush1.msra.mxu0 0.0
      %391 = vmatprep.subr.mxu0 0.0
      %392 = vmatpush1.msra.mxu0 0.0
      %393 = vmatprep.subr.mxu0 0.0
      %394 = vmatpush1.msra.mxu0 0.0
      %395 = vmatprep.subr.mxu0 0.0
      %396 = vmatpush1.msra.mxu0 0.0
      %397 = vmatprep.subr.mxu0 0.0
      %398 = vmatpush1.msra.mxu0 0.0
      %399 = vmatprep.subr.mxu0 0.0
      %400 = vmatpush1.msra.mxu0 0.0
      %401 = vmatprep.subr.mxu0 0.0
      %402 = vmatpush1.msra.mxu0 0.0
      %403 = vmatprep.subr.mxu0 0.0
      %404 = vmatpush1.msra.mxu0 0.0
      %405 = vmatprep.subr.mxu0 0.0
      %406 = vmatpush1.msra.mxu0 0.0
      %407 = vmatprep.subr.mxu0 0.0
      %408 = vmatpush1.msra.mxu0 0.0
      %409 = vmatprep.subr.mxu0 0.0
      %410 = vmatpush1.msra.mxu0 0.0
      %411 = vmatprep.subr.mxu0 0.0
      %412 = vmatpush1.msra.mxu0 0.0
      %413 = vmatprep.subr.mxu0 0.0
      %414 = vmatpush1.msra.mxu0 0.0
      %415 = vmatprep.subr.mxu0 0.0
      %416 = vmatpush1.msra.mxu0 0.0
      %417 = vmatprep.subr.mxu0 0.0
      %418 = vmatpush1.msra.mxu0 0.0
      %419 = vmatprep.subr.mxu0 0.0
      %420 = vmatpush1.msra.mxu0 0.0
      %421 = vmatprep.subr.mxu0 0.0
      %422 = vmatpush1.msra.mxu0 0.0
      %423 = vmatprep.subr.mxu0 0.0
      %424 = vmatpush1.msra.mxu0 0.0
      %425 = vmatprep.subr.mxu0 0.0
      %426 = vmatpush1.msra.mxu0 0.0
      %427 = vmatprep.subr.mxu0 0.0
      %428 = vmatpush1.msra.mxu0 0.0
      %429 = vmatprep.subr.mxu0 0.0
      %430 = vmatpush1.msra.mxu0 0.0
      %431 = vmatprep.subr.mxu0 0.0
      %432 = vmatpush1.msra.mxu0 0.0
      %433 = vmatprep.subr.mxu0 0.0
      %434 = vmatpush1.msra.mxu0 0.0
      %435 = vmatprep.subr.mxu0 0.0
      %436 = vmatpush1.msra.mxu0 0.0
      %437 = vmatprep.mubr.f32.mxu0 0.0
      %v438 = vand.u32 %v325, 4294901760
      %v439 = vsub.f32 %v325, %v438
      %v440 = vand.u32 %v439, 4294901760
      %v441 = vsub.f32 %v439, %v440
      %v442 = vand.u32 %v441, 4294901760
      %443 = vmatmul.mubr.f32.gmra.mrb[0].mxu0 %v442
      %v444 = vpop.f32.mrb[0].mxu0
      %v445 = vadd.f32 0.0, %v444
      %v446 = vpop.f32.mrb[0].mxu0
      %447 = vmatprep.mubr.f32.mxu0 0.0
      %v448 = vand.u32 %v328, 4294901760
      %v449 = vsub.f32 %v328, %v448
      %v450 = vand.u32 %v449, 4294901760
      %v451 = vsub.f32 %v449, %v450
      %v452 = vand.u32 %v451, 4294901760
      %453 = vmatmul.mubr.f32.gmra.mrb[0].mxu0 %v452
      %v454 = vpop.f32.mrb[0].mxu0
      %v455 = vadd.f32 0.0, %v454
      %v456 = vpop.f32.mrb[0].mxu0
      %457 = vmatprep.mubr.f32.mxu0 0.0
      %v458 = vand.u32 %v331, 4294901760
      %v459 = vsub.f32 %v331, %v458
      %v460 = vand.u32 %v459, 4294901760
      %v461 = vsub.f32 %v459, %v460
      %v462 = vand.u32 %v461, 4294901760
      %463 = vmatmul.mubr.f32.gmra.mrb[0].mxu0 %v462
      %v464 = vpop.f32.mrb[0].mxu0
      %v465 = vadd.f32 0.0, %v464
      %v466 = vpop.f32.mrb[0].mxu0
      %467 = vmatprep.mubr.f32.mxu0 0.0
      %v468 = vand.u32 %v334, 4294901760
      %v469 = vsub.f32 %v334, %v468
      %v470 = vand.u32 %v469, 4294901760
      %v471 = vsub.f32 %v469, %v470
      %v472 = vand.u32 %v471, 4294901760
      %473 = vmatmul.mubr.f32.gmra.mrb[0].mxu0 %v472
      %v474 = vpop.f32.mrb[0].mxu0
      %v475 = vadd.f32 0.0, %v474
      %v476 = vpop.f32.mrb[0].mxu0
      %477 = vmatprep.mubr.f32.mxu0 0.0
      %v478 = vand.u32 %v337, 4294901760
      %v479 = vsub.f32 %v337, %v478
      %v480 = vand.u32 %v479, 4294901760
      %v481 = vsub.f32 %v479, %v480
      %v482 = vand.u32 %v481, 4294901760
      %483 = vmatmul.mubr.f32.gmra.mrb[0].mxu0 %v482
      %v484 = vpop.f32.mrb[0].mxu0
      %v485 = vadd.f32 0.0, %v484
      %v486 = vpop.f32.mrb[0].mxu0
      %487 = vmatprep.mubr.f32.mxu0 0.0
      %v488 = vand.u32 %v340, 4294901760
      %v489 = vsub.f32 %v340, %v488
      %v490 = vand.u32 %v489, 4294901760
      %v491 = vsub.f32 %v489, %v490
      %v492 = vand.u32 %v491, 4294901760
      %493 = vmatmul.mubr.f32.gmra.mrb[0].mxu0 %v492
      %v494 = vpop.f32.mrb[0].mxu0
      %v495 = vadd.f32 0.0, %v494
      %v496 = vpop.f32.mrb[0].mxu0
      %497 = vmatprep.mubr.f32.mxu0 0.0
      %v498 = vand.u32 %v343, 4294901760
      %v499 = vsub.f32 %v343, %v498
      %v500 = vand.u32 %v499, 4294901760
      %v501 = vsub.f32 %v499, %v500
      %v502 = vand.u32 %v501, 4294901760
      %503 = vmatmul.mubr.f32.gmra.mrb[0].mxu0 %v502
      %v504 = vpop.f32.mrb[0].mxu0
      %v505 = vadd.f32 0.0, %v504
      %v506 = vpop.f32.mrb[0].mxu0
      %507 = vmatprep.mubr.f32.mxu0 0.0
      %v508 = vand.u32 %v346, 4294901760
      %v509 = vsub.f32 %v346, %v508
      %v510 = vand.u32 %v509, 4294901760
      %v511 = vsub.f32 %v509, %v510
      %v512 = vand.u32 %v511, 4294901760
      %513 = vmatmul.mubr.f32.gmra.mrb[0].mxu0 %v512
      %v514 = vpop.f32.mrb[0].mxu0
      %v515 = vadd.f32 0.0, %v514
      %v516 = vpop.f32.mrb[0].mxu0
      %517 = vmatprep.mubr.f32.mxu0 0.0
      %v518 = vand.u32 %v349, 4294901760
      %v519 = vsub.f32 %v349, %v518
      %v520 = vand.u32 %v519, 4294901760
      %v521 = vsub.f32 %v519, %v520
      %v522 = vand.u32 %v521, 4294901760
      %523 = vmatmul.mubr.f32.gmra.mrb[0].mxu0 %v522
      %v524 = vpop.f32.mrb[0].mxu0
      %v525 = vadd.f32 0.0, %v524
      %v526 = vpop.f32.mrb[0].mxu0
      %527 = vmatprep.mubr.f32.mxu0 0.0
      %v528 = vand.u32 %v352, 4294901760
      %v529 = vsub.f32 %v352, %v528
      %v530 = vand.u32 %v529, 4294901760
      %v531 = vsub.f32 %v529, %v530
      %v532 = vand.u32 %v531, 4294901760
      %533 = vmatmul.mubr.f32.gmra.mrb[0].mxu0 %v532
      %v534 = vpop.f32.mrb[0].mxu0
      %v535 = vadd.f32 0.0, %v534
      %v536 = vpop.f32.mrb[0].mxu0
      %537 = vmatprep.mubr.f32.mxu0 0.0
      %v538 = vand.u32 %v355, 4294901760
      %v539 = vsub.f32 %v355, %v538
      %v540 = vand.u32 %v539, 4294901760
      %v541 = vsub.f32 %v539, %v540
      %v542 = vand.u32 %v541, 4294901760
      %543 = vmatmul.mubr.f32.gmra.mrb[0].mxu0 %v542
      %v544 = vpop.f32.mrb[0].mxu0
      %v545 = vadd.f32 0.0, %v544
      %v546 = vpop.f32.mrb[0].mxu0
      %547 = vmatprep.mubr.f32.mxu0 0.0
      %v548 = vand.u32 %v358, 4294901760
      %v549 = vsub.f32 %v358, %v548
      %v550 = vand.u32 %v549, 4294901760
      %v551 = vsub.f32 %v549, %v550
      %v552 = vand.u32 %v551, 4294901760
      %553 = vmatmul.mubr.f32.gmra.mrb[0].mxu0 %v552
      %v554 = vpop.f32.mrb[0].mxu0
      %v555 = vadd.f32 0.0, %v554
      %v556 = vpop.f32.mrb[0].mxu0
      %557 = vmatprep.mubr.f32.mxu0 0.0
      %v558 = vand.u32 %v361, 4294901760
      %v559 = vsub.f32 %v361, %v558
      %v560 = vand.u32 %v559, 4294901760
      %v561 = vsub.f32 %v559, %v560
      %v562 = vand.u32 %v561, 4294901760
      %563 = vmatmul.mubr.f32.gmra.mrb[0].mxu0 %v562
      %v564 = vpop.f32.mrb[0].mxu0
      %v565 = vadd.f32 0.0, %v564
      %v566 = vpop.f32.mrb[0].mxu0
      %567 = vmatprep.mubr.f32.mxu0 0.0
      %v568 = vand.u32 %v364, 4294901760
      %v569 = vsub.f32 %v364, %v568
      %v570 = vand.u32 %v569, 4294901760
      %v571 = vsub.f32 %v569, %v570
      %v572 = vand.u32 %v571, 4294901760
      %573 = vmatmul.mubr.f32.gmra.mrb[0].mxu0 %v572
      %v574 = vpop.f32.mrb[0].mxu0
      %v575 = vadd.f32 0.0, %v574
      %v576 = vpop.f32.mrb[0].mxu0
      %577 = vmatprep.mubr.f32.mxu0 0.0
      %v578 = vand.u32 %v367, 4294901760
      %v579 = vsub.f32 %v367, %v578
      %v580 = vand.u32 %v579, 4294901760
      %v581 = vsub.f32 %v579, %v580
      %v582 = vand.u32 %v581, 4294901760
      %583 = vmatmul.mubr.f32.gmra.mrb[0].mxu0 %v582
      %v584 = vpop.f32.mrb[0].mxu0
      %v585 = vadd.f32 0.0, %v584
      %v586 = vpop.f32.mrb[0].mxu0
      %587 = vmatprep.mubr.f32.mxu0 0.0
      %v588 = vand.u32 %v370, 4294901760
      %v589 = vsub.f32 %v370, %v588
      %v590 = vand.u32 %v589, 4294901760
      %v591 = vsub.f32 %v589, %v590
      %v592 = vand.u32 %v591, 4294901760
      %593 = vmatmul.mubr.f32.gmra.mrb[0].mxu0 %v592
      %v594 = vpop.f32.mrb[0].mxu0
      %v595 = vadd.f32 0.0, %v594
      %v596 = vpop.f32.mrb[0].mxu0
      %597 = vdwg.mxu0
      %598 = vmatprep.subr.mxu0 0.0
      %v599 = vand.u32 %v290, 4294901760
      %v600 = vsub.f32 %v290, %v599
      %v601 = vand.u32 %v600, 4294901760
      %v602 = vsub.f32 %v600, %v601
      %v603 = vand.u32 %v602, 4294901760
      %604 = vmatpush1.msra.mxu0 %v603
      %605 = vmatprep.subr.mxu0 0.0
      %606 = vmatpush1.msra.mxu0 0.0
      %607 = vmatprep.subr.mxu0 0.0
      %608 = vmatpush1.msra.mxu0 0.0
      %609 = vmatprep.subr.mxu0 0.0
      %610 = vmatpush1.msra.mxu0 0.0
      %611 = vmatprep.subr.mxu0 0.0
      %612 = vmatpush1.msra.mxu0 0.0
      %613 = vmatprep.subr.mxu0 0.0
      %614 = vmatpush1.msra.mxu0 0.0
      %615 = vmatprep.subr.mxu0 0.0
      %616 = vmatpush1.msra.mxu0 0.0
      %617 = vmatprep.subr.mxu0 0.0
      %618 = vmatpush1.msra.mxu0 0.0
      %619 = vmatprep.subr.mxu0 0.0
      %620 = vmatpush1.msra.mxu0 0.0
      %621 = vmatprep.subr.mxu0 0.0
      %622 = vmatpush1.msra.mxu0 0.0
      %623 = vmatprep.subr.mxu0 0.0
      %624 = vmatpush1.msra.mxu0 0.0
      %625 = vmatprep.subr.mxu0 0.0
      %626 = vmatpush1.msra.mxu0 0.0
      %627 = vmatprep.subr.mxu0 0.0
      %628 = vmatpush1.msra.mxu0 0.0
      %629 = vmatprep.subr.mxu0 0.0
      %630 = vmatpush1.msra.mxu0 0.0
      %631 = vmatprep.subr.mxu0 0.0
      %632 = vmatpush1.msra.mxu0 0.0
      %633 = vmatprep.subr.mxu0 0.0
      %634 = vmatpush1.msra.mxu0 0.0
      %635 = vmatprep.subr.mxu0 0.0
      %636 = vmatpush1.msra.mxu0 0.0
      %637 = vmatprep.subr.mxu0 0.0
      %638 = vmatpush1.msra.mxu0 0.0
      %639 = vmatprep.subr.mxu0 0.0
      %640 = vmatpush1.msra.mxu0 0.0
      %641 = vmatprep.subr.mxu0 0.0
      %642 = vmatpush1.msra.mxu0 0.0
      %643 = vmatprep.subr.mxu0 0.0
      %644 = vmatpush1.msra.mxu0 0.0
      %645 = vmatprep.subr.mxu0 0.0
      %646 = vmatpush1.msra.mxu0 0.0
      %647 = vmatprep.subr.mxu0 0.0
      %648 = vmatpush1.msra.mxu0 0.0
      %649 = vmatprep.subr.mxu0 0.0
      %650 = vmatpush1.msra.mxu0 0.0
      %651 = vmatprep.subr.mxu0 0.0
      %652 = vmatpush1.msra.mxu0 0.0
      %653 = vmatprep.subr.mxu0 0.0
      %654 = vmatpush1.msra.mxu0 0.0
      %655 = vmatprep.subr.mxu0 0.0
      %656 = vmatpush1.msra.mxu0 0.0
      %657 = vmatprep.subr.mxu0 0.0
      %658 = vmatpush1.msra.mxu0 0.0
      %659 = vmatprep.subr.mxu0 0.0
      %660 = vmatpush1.msra.mxu0 0.0
      %661 = vmatprep.subr.mxu0 0.0
      %662 = vmatpush1.msra.mxu0 0.0
      %663 = vmatprep.subr.mxu0 0.0
      %664 = vmatpush1.msra.mxu0 0.0
      %665 = vmatprep.subr.mxu0 0.0
      %666 = vmatpush1.msra.mxu0 0.0
      %667 = vmatprep.mubr.f32.mxu0 0.0
      %v668 = vand.u32 %v325, 4294901760
      %669 = vmatmul.mubr.f32.gmra.mrb[0].mxu0 %v668
      %v670 = vpop.f32.mrb[0].mxu0
      %v671 = vadd.f32 %v445, %v670
      %v672 = vpop.f32.mrb[0].mxu0
      %673 = vmatprep.mubr.f32.mxu0 0.0
      %v674 = vand.u32 %v328, 4294901760
      %675 = vmatmul.mubr.f32.gmra.mrb[0].mxu0 %v674
      %v676 = vpop.f32.mrb[0].mxu0
      %v677 = vadd.f32 %v455, %v676
      %v678 = vpop.f32.mrb[0].mxu0
      %679 = vmatprep.mubr.f32.mxu0 0.0
      %v680 = vand.u32 %v331, 4294901760
      %681 = vmatmul.mubr.f32.gmra.mrb[0].mxu0 %v680
      %v682 = vpop.f32.mrb[0].mxu0
      %v683 = vadd.f32 %v465, %v682
      %v684 = vpop.f32.mrb[0].mxu0
      %685 = vmatprep.mubr.f32.mxu0 0.0
      %v686 = vand.u32 %v334, 4294901760
      %687 = vmatmul.mubr.f32.gmra.mrb[0].mxu0 %v686
      %v688 = vpop.f32.mrb[0].mxu0
      %v689 = vadd.f32 %v475, %v688
      %v690 = vpop.f32.mrb[0].mxu0
      %691 = vmatprep.mubr.f32.mxu0 0.0
      %v692 = vand.u32 %v337, 4294901760
      %693 = vmatmul.mubr.f32.gmra.mrb[0].mxu0 %v692
      %v694 = vpop.f32.mrb[0].mxu0
      %v695 = vadd.f32 %v485, %v694
      %v696 = vpop.f32.mrb[0].mxu0
      %697 = vmatprep.mubr.f32.mxu0 0.0
      %v698 = vand.u32 %v340, 4294901760
      %699 = vmatmul.mubr.f32.gmra.mrb[0].mxu0 %v698
      %v700 = vpop.f32.mrb[0].mxu0
      %v701 = vadd.f32 %v495, %v700
      %v702 = vpop.f32.mrb[0].mxu0
      %703 = vmatprep.mubr.f32.mxu0 0.0
      %v704 = vand.u32 %v343, 4294901760
      %705 = vmatmul.mubr.f32.gmra.mrb[0].mxu0 %v704
      %v706 = vpop.f32.mrb[0].mxu0
      %v707 = vadd.f32 %v505, %v706
      %v708 = vpop.f32.mrb[0].mxu0
      %709 = vmatprep.mubr.f32.mxu0 0.0
      %v710 = vand.u32 %v346, 4294901760
      %711 = vmatmul.mubr.f32.gmra.mrb[0].mxu0 %v710
      %v712 = vpop.f32.mrb[0].mxu0
      %v713 = vadd.f32 %v515, %v712
      %v714 = vpop.f32.mrb[0].mxu0
      %715 = vmatprep.mubr.f32.mxu0 0.0
      %v716 = vand.u32 %v349, 4294901760
      %717 = vmatmul.mubr.f32.gmra.mrb[0].mxu0 %v716
      %v718 = vpop.f32.mrb[0].mxu0
      %v719 = vadd.f32 %v525, %v718
      %v720 = vpop.f32.mrb[0].mxu0
      %721 = vmatprep.mubr.f32.mxu0 0.0
      %v722 = vand.u32 %v352, 4294901760
      %723 = vmatmul.mubr.f32.gmra.mrb[0].mxu0 %v722
      %v724 = vpop.f32.mrb[0].mxu0
      %v725 = vadd.f32 %v535, %v724
      %v726 = vpop.f32.mrb[0].mxu0
      %727 = vmatprep.mubr.f32.mxu0 0.0
      %v728 = vand.u32 %v355, 4294901760
      %729 = vmatmul.mubr.f32.gmra.mrb[0].mxu0 %v728
      %v730 = vpop.f32.mrb[0].mxu0
      %v731 = vadd.f32 %v545, %v730
      %v732 = vpop.f32.mrb[0].mxu0
      %733 = vmatprep.mubr.f32.mxu0 0.0
      %v734 = vand.u32 %v358, 4294901760
      %735 = vmatmul.mubr.f32.gmra.mrb[0].mxu0 %v734
      %v736 = vpop.f32.mrb[0].mxu0
      %v737 = vadd.f32 %v555, %v736
      %v738 = vpop.f32.mrb[0].mxu0
      %739 = vmatprep.mubr.f32.mxu0 0.0
      %v740 = vand.u32 %v361, 4294901760
      %741 = vmatmul.mubr.f32.gmra.mrb[0].mxu0 %v740
      %v742 = vpop.f32.mrb[0].mxu0
      %v743 = vadd.f32 %v565, %v742
      %v744 = vpop.f32.mrb[0].mxu0
      %745 = vmatprep.mubr.f32.mxu0 0.0
      %v746 = vand.u32 %v364, 4294901760
      %747 = vmatmul.mubr.f32.gmra.mrb[0].mxu0 %v746
      %v748 = vpop.f32.mrb[0].mxu0
      %v749 = vadd.f32 %v575, %v748
      %v750 = vpop.f32.mrb[0].mxu0
      %751 = vmatprep.mubr.f32.mxu0 0.0
      %v752 = vand.u32 %v367, 4294901760
      %753 = vmatmul.mubr.f32.gmra.mrb[0].mxu0 %v752
      %v754 = vpop.f32.mrb[0].mxu0
      %v755 = vadd.f32 %v585, %v754
      %v756 = vpop.f32.mrb[0].mxu0
      %757 = vmatprep.mubr.f32.mxu0 0.0
      %v758 = vand.u32 %v370, 4294901760
      %759 = vmatmul.mubr.f32.gmra.mrb[0].mxu0 %v758
      %v760 = vpop.f32.mrb[0].mxu0
      %v761 = vadd.f32 %v595, %v760
      %v762 = vpop.f32.mrb[0].mxu0
      %763 = vdwg.mxu0
      %764 = vmatprep.subr.mxu0 0.0
      %v765 = vand.u32 %v290, 4294901760
      %v766 = vsub.f32 %v290, %v765
      %767 = vmatpush1.msra.mxu0 %v766
      %768 = vmatprep.subr.mxu0 0.0
      %769 = vmatpush1.msra.mxu0 0.0
      %770 = vmatprep.subr.mxu0 0.0
      %771 = vmatpush1.msra.mxu0 0.0
      %772 = vmatprep.subr.mxu0 0.0
      %773 = vmatpush1.msra.mxu0 0.0
      %774 = vmatprep.subr.mxu0 0.0
      %775 = vmatpush1.msra.mxu0 0.0
      %776 = vmatprep.subr.mxu0 0.0
      %777 = vmatpush1.msra.mxu0 0.0
      %778 = vmatprep.subr.mxu0 0.0
      %779 = vmatpush1.msra.mxu0 0.0
      %780 = vmatprep.subr.mxu0 0.0
      %781 = vmatpush1.msra.mxu0 0.0
      %782 = vmatprep.subr.mxu0 0.0
      %783 = vmatpush1.msra.mxu0 0.0
      %784 = vmatprep.subr.mxu0 0.0
      %785 = vmatpush1.msra.mxu0 0.0
      %786 = vmatprep.subr.mxu0 0.0
      %787 = vmatpush1.msra.mxu0 0.0
      %788 = vmatprep.subr.mxu0 0.0
      %789 = vmatpush1.msra.mxu0 0.0
      %790 = vmatprep.subr.mxu0 0.0
      %791 = vmatpush1.msra.mxu0 0.0
      %792 = vmatprep.subr.mxu0 0.0
      %793 = vmatpush1.msra.mxu0 0.0
      %794 = vmatprep.subr.mxu0 0.0
      %795 = vmatpush1.msra.mxu0 0.0
      %796 = vmatprep.subr.mxu0 0.0
      %797 = vmatpush1.msra.mxu0 0.0
      %798 = vmatprep.subr.mxu0 0.0
      %799 = vmatpush1.msra.mxu0 0.0
      %800 = vmatprep.subr.mxu0 0.0
      %801 = vmatpush1.msra.mxu0 0.0
      %802 = vmatprep.subr.mxu0 0.0
      %803 = vmatpush1.msra.mxu0 0.0
      %804 = vmatprep.subr.mxu0 0.0
      %805 = vmatpush1.msra.mxu0 0.0
      %806 = vmatprep.subr.mxu0 0.0
      %807 = vmatpush1.msra.mxu0 0.0
      %808 = vmatprep.subr.mxu0 0.0
      %809 = vmatpush1.msra.mxu0 0.0
      %810 = vmatprep.subr.mxu0 0.0
      %811 = vmatpush1.msra.mxu0 0.0
      %812 = vmatprep.subr.mxu0 0.0
      %813 = vmatpush1.msra.mxu0 0.0
      %814 = vmatprep.subr.mxu0 0.0
      %815 = vmatpush1.msra.mxu0 0.0
      %816 = vmatprep.subr.mxu0 0.0
      %817 = vmatpush1.msra.mxu0 0.0
      %818 = vmatprep.subr.mxu0 0.0
      %819 = vmatpush1.msra.mxu0 0.0
      %820 = vmatprep.subr.mxu0 0.0
      %821 = vmatpush1.msra.mxu0 0.0
      %822 = vmatprep.subr.mxu0 0.0
      %823 = vmatpush1.msra.mxu0 0.0
      %824 = vmatprep.subr.mxu0 0.0
      %825 = vmatpush1.msra.mxu0 0.0
      %826 = vmatprep.subr.mxu0 0.0
      %827 = vmatpush1.msra.mxu0 0.0
      %828 = vmatprep.subr.mxu0 0.0
      %829 = vmatpush1.msra.mxu0 0.0
      %830 = vmatprep.mubr.f32.mxu0 0.0
      %v831 = vand.u32 %v325, 4294901760
      %v832 = vsub.f32 %v325, %v831
      %833 = vmatmul.mubr.f32.gmra.mrb[0].mxu0 %v832
      %v834 = vpop.f32.mrb[0].mxu0
      %v835 = vadd.f32 %v671, %v834
      %v836 = vpop.f32.mrb[0].mxu0
      %837 = vmatprep.mubr.f32.mxu0 0.0
      %v838 = vand.u32 %v328, 4294901760
      %v839 = vsub.f32 %v328, %v838
      %840 = vmatmul.mubr.f32.gmra.mrb[0].mxu0 %v839
      %v841 = vpop.f32.mrb[0].mxu0
      %v842 = vadd.f32 %v677, %v841
      %v843 = vpop.f32.mrb[0].mxu0
      %844 = vmatprep.mubr.f32.mxu0 0.0
      %v845 = vand.u32 %v331, 4294901760
      %v846 = vsub.f32 %v331, %v845
      %847 = vmatmul.mubr.f32.gmra.mrb[0].mxu0 %v846
      %v848 = vpop.f32.mrb[0].mxu0
      %v849 = vadd.f32 %v683, %v848
      %v850 = vpop.f32.mrb[0].mxu0
      %851 = vmatprep.mubr.f32.mxu0 0.0
      %v852 = vand.u32 %v334, 4294901760
      %v853 = vsub.f32 %v334, %v852
      %854 = vmatmul.mubr.f32.gmra.mrb[0].mxu0 %v853
      %v855 = vpop.f32.mrb[0].mxu0
      %v856 = vadd.f32 %v689, %v855
      %v857 = vpop.f32.mrb[0].mxu0
      %858 = vmatprep.mubr.f32.mxu0 0.0
      %v859 = vand.u32 %v337, 4294901760
      %v860 = vsub.f32 %v337, %v859
      %861 = vmatmul.mubr.f32.gmra.mrb[0].mxu0 %v860
      %v862 = vpop.f32.mrb[0].mxu0
      %v863 = vadd.f32 %v695, %v862
      %v864 = vpop.f32.mrb[0].mxu0
      %865 = vmatprep.mubr.f32.mxu0 0.0
      %v866 = vand.u32 %v340, 4294901760
      %v867 = vsub.f32 %v340, %v866
      %868 = vmatmul.mubr.f32.gmra.mrb[0].mxu0 %v867
      %v869 = vpop.f32.mrb[0].mxu0
      %v870 = vadd.f32 %v701, %v869
      %v871 = vpop.f32.mrb[0].mxu0
      %872 = vmatprep.mubr.f32.mxu0 0.0
      %v873 = vand.u32 %v343, 4294901760
      %v874 = vsub.f32 %v343, %v873
      %875 = vmatmul.mubr.f32.gmra.mrb[0].mxu0 %v874
      %v876 = vpop.f32.mrb[0].mxu0
      %v877 = vadd.f32 %v707, %v876
      %v878 = vpop.f32.mrb[0].mxu0
      %879 = vmatprep.mubr.f32.mxu0 0.0
      %v880 = vand.u32 %v346, 4294901760
      %v881 = vsub.f32 %v346, %v880
      %882 = vmatmul.mubr.f32.gmra.mrb[0].mxu0 %v881
      %v883 = vpop.f32.mrb[0].mxu0
      %v884 = vadd.f32 %v713, %v883
      %v885 = vpop.f32.mrb[0].mxu0
      %886 = vmatprep.mubr.f32.mxu0 0.0
      %v887 = vand.u32 %v349, 4294901760
      %v888 = vsub.f32 %v349, %v887
      %889 = vmatmul.mubr.f32.gmra.mrb[0].mxu0 %v888
      %v890 = vpop.f32.mrb[0].mxu0
      %v891 = vadd.f32 %v719, %v890
      %v892 = vpop.f32.mrb[0].mxu0
      %893 = vmatprep.mubr.f32.mxu0 0.0
      %v894 = vand.u32 %v352, 4294901760
      %v895 = vsub.f32 %v352, %v894
      %896 = vmatmul.mubr.f32.gmra.mrb[0].mxu0 %v895
      %v897 = vpop.f32.mrb[0].mxu0
      %v898 = vadd.f32 %v725, %v897
      %v899 = vpop.f32.mrb[0].mxu0
      %900 = vmatprep.mubr.f32.mxu0 0.0
      %v901 = vand.u32 %v355, 4294901760
      %v902 = vsub.f32 %v355, %v901
      %903 = vmatmul.mubr.f32.gmra.mrb[0].mxu0 %v902
      %v904 = vpop.f32.mrb[0].mxu0
      %v905 = vadd.f32 %v731, %v904
      %v906 = vpop.f32.mrb[0].mxu0
      %907 = vmatprep.mubr.f32.mxu0 0.0
      %v908 = vand.u32 %v358, 4294901760
      %v909 = vsub.f32 %v358, %v908
      %910 = vmatmul.mubr.f32.gmra.mrb[0].mxu0 %v909
      %v911 = vpop.f32.mrb[0].mxu0
      %v912 = vadd.f32 %v737, %v911
      %v913 = vpop.f32.mrb[0].mxu0
      %914 = vmatprep.mubr.f32.mxu0 0.0
      %v915 = vand.u32 %v361, 4294901760
      %v916 = vsub.f32 %v361, %v915
      %917 = vmatmul.mubr.f32.gmra.mrb[0].mxu0 %v916
      %v918 = vpop.f32.mrb[0].mxu0
      %v919 = vadd.f32 %v743, %v918
      %v920 = vpop.f32.mrb[0].mxu0
      %921 = vmatprep.mubr.f32.mxu0 0.0
      %v922 = vand.u32 %v364, 4294901760
      %v923 = vsub.f32 %v364, %v922
      %924 = vmatmul.mubr.f32.gmra.mrb[0].mxu0 %v923
      %v925 = vpop.f32.mrb[0].mxu0
      %v926 = vadd.f32 %v749, %v925
      %v927 = vpop.f32.mrb[0].mxu0
      %928 = vmatprep.mubr.f32.mxu0 0.0
      %v929 = vand.u32 %v367, 4294901760
      %v930 = vsub.f32 %v367, %v929
      %931 = vmatmul.mubr.f32.gmra.mrb[0].mxu0 %v930
      %v932 = vpop.f32.mrb[0].mxu0
      %v933 = vadd.f32 %v755, %v932
      %v934 = vpop.f32.mrb[0].mxu0
      %935 = vmatprep.mubr.f32.mxu0 0.0
      %v936 = vand.u32 %v370, 4294901760
      %v937 = vsub.f32 %v370, %v936
      %938 = vmatmul.mubr.f32.gmra.mrb[0].mxu0 %v937
      %v939 = vpop.f32.mrb[0].mxu0
      %v940 = vadd.f32 %v761, %v939
      %v941 = vpop.f32.mrb[0].mxu0
      %942 = vdwg.mxu0
      %943 = vmatprep.subr.mxu0 0.0
      %v944 = vand.u32 %v290, 4294901760
      %945 = vmatpush1.msra.mxu0 %v944
      %946 = vmatprep.subr.mxu0 0.0
      %947 = vmatpush1.msra.mxu0 0.0
      %948 = vmatprep.subr.mxu0 0.0
      %949 = vmatpush1.msra.mxu0 0.0
      %950 = vmatprep.subr.mxu0 0.0
      %951 = vmatpush1.msra.mxu0 0.0
      %952 = vmatprep.subr.mxu0 0.0
      %953 = vmatpush1.msra.mxu0 0.0
      %954 = vmatprep.subr.mxu0 0.0
      %955 = vmatpush1.msra.mxu0 0.0
      %956 = vmatprep.subr.mxu0 0.0
      %957 = vmatpush1.msra.mxu0 0.0
      %958 = vmatprep.subr.mxu0 0.0
      %959 = vmatpush1.msra.mxu0 0.0
      %960 = vmatprep.subr.mxu0 0.0
      %961 = vmatpush1.msra.mxu0 0.0
      %962 = vmatprep.subr.mxu0 0.0
      %963 = vmatpush1.msra.mxu0 0.0
      %964 = vmatprep.subr.mxu0 0.0
      %965 = vmatpush1.msra.mxu0 0.0
      %966 = vmatprep.subr.mxu0 0.0
      %967 = vmatpush1.msra.mxu0 0.0
      %968 = vmatprep.subr.mxu0 0.0
      %969 = vmatpush1.msra.mxu0 0.0
      %970 = vmatprep.subr.mxu0 0.0
      %971 = vmatpush1.msra.mxu0 0.0
      %972 = vmatprep.subr.mxu0 0.0
      %973 = vmatpush1.msra.mxu0 0.0
      %974 = vmatprep.subr.mxu0 0.0
      %975 = vmatpush1.msra.mxu0 0.0
      %976 = vmatprep.subr.mxu0 0.0
      %977 = vmatpush1.msra.mxu0 0.0
      %978 = vmatprep.subr.mxu0 0.0
      %979 = vmatpush1.msra.mxu0 0.0
      %980 = vmatprep.subr.mxu0 0.0
      %981 = vmatpush1.msra.mxu0 0.0
      %982 = vmatprep.subr.mxu0 0.0
      %983 = vmatpush1.msra.mxu0 0.0
      %984 = vmatprep.subr.mxu0 0.0
      %985 = vmatpush1.msra.mxu0 0.0
      %986 = vmatprep.subr.mxu0 0.0
      %987 = vmatpush1.msra.mxu0 0.0
      %988 = vmatprep.subr.mxu0 0.0
      %989 = vmatpush1.msra.mxu0 0.0
      %990 = vmatprep.subr.mxu0 0.0
      %991 = vmatpush1.msra.mxu0 0.0
      %992 = vmatprep.subr.mxu0 0.0
      %993 = vmatpush1.msra.mxu0 0.0
      %994 = vmatprep.subr.mxu0 0.0
      %995 = vmatpush1.msra.mxu0 0.0
      %996 = vmatprep.subr.mxu0 0.0
      %997 = vmatpush1.msra.mxu0 0.0
      %998 = vmatprep.subr.mxu0 0.0
      %999 = vmatpush1.msra.mxu0 0.0
      %1000 = vmatprep.subr.mxu0 0.0
      %1001 = vmatpush1.msra.mxu0 0.0
      %1002 = vmatprep.subr.mxu0 0.0
      %1003 = vmatpush1.msra.mxu0 0.0
      %1004 = vmatprep.subr.mxu0 0.0
      %1005 = vmatpush1.msra.mxu0 0.0
      %1006 = vmatprep.subr.mxu0 0.0
      %1007 = vmatpush1.msra.mxu0 0.0
      %1008 = vmatprep.mubr.f32.mxu0 0.0
      %v1009 = vand.u32 %v325, 4294901760
      %v1010 = vsub.f32 %v325, %v1009
      %v1011 = vand.u32 %v1010, 4294901760
      %1012 = vmatmul.mubr.f32.gmra.mrb[0].mxu0 %v1011
      %v1013 = vpop.f32.mrb[0].mxu0
      %v1014 = vadd.f32 %v835, %v1013
      %v1015 = vpop.f32.mrb[0].mxu0
      %1016 = vmatprep.mubr.f32.mxu0 0.0
      %v1017 = vand.u32 %v328, 4294901760
      %v1018 = vsub.f32 %v328, %v1017
      %v1019 = vand.u32 %v1018, 4294901760
      %1020 = vmatmul.mubr.f32.gmra.mrb[0].mxu0 %v1019
      %v1021 = vpop.f32.mrb[0].mxu0
      %v1022 = vadd.f32 %v842, %v1021
      %v1023 = vpop.f32.mrb[0].mxu0
      %1024 = vmatprep.mubr.f32.mxu0 0.0
      %v1025 = vand.u32 %v331, 4294901760
      %v1026 = vsub.f32 %v331, %v1025
      %v1027 = vand.u32 %v1026, 4294901760
      %1028 = vmatmul.mubr.f32.gmra.mrb[0].mxu0 %v1027
      %v1029 = vpop.f32.mrb[0].mxu0
      %v1030 = vadd.f32 %v849, %v1029
      %v1031 = vpop.f32.mrb[0].mxu0
      %1032 = vmatprep.mubr.f32.mxu0 0.0
      %v1033 = vand.u32 %v334, 4294901760
      %v1034 = vsub.f32 %v334, %v1033
      %v1035 = vand.u32 %v1034, 4294901760
      %1036 = vmatmul.mubr.f32.gmra.mrb[0].mxu0 %v1035
      %v1037 = vpop.f32.mrb[0].mxu0
      %v1038 = vadd.f32 %v856, %v1037
      %v1039 = vpop.f32.mrb[0].mxu0
      %1040 = vmatprep.mubr.f32.mxu0 0.0
      %v1041 = vand.u32 %v337, 4294901760
      %v1042 = vsub.f32 %v337, %v1041
      %v1043 = vand.u32 %v1042, 4294901760
      %1044 = vmatmul.mubr.f32.gmra.mrb[0].mxu0 %v1043
      %v1045 = vpop.f32.mrb[0].mxu0
      %v1046 = vadd.f32 %v863, %v1045
      %v1047 = vpop.f32.mrb[0].mxu0
      %1048 = vmatprep.mubr.f32.mxu0 0.0
      %v1049 = vand.u32 %v340, 4294901760
      %v1050 = vsub.f32 %v340, %v1049
      %v1051 = vand.u32 %v1050, 4294901760
      %1052 = vmatmul.mubr.f32.gmra.mrb[0].mxu0 %v1051
      %v1053 = vpop.f32.mrb[0].mxu0
      %v1054 = vadd.f32 %v870, %v1053
      %v1055 = vpop.f32.mrb[0].mxu0
      %1056 = vmatprep.mubr.f32.mxu0 0.0
      %v1057 = vand.u32 %v343, 4294901760
      %v1058 = vsub.f32 %v343, %v1057
      %v1059 = vand.u32 %v1058, 4294901760
      %1060 = vmatmul.mubr.f32.gmra.mrb[0].mxu0 %v1059
      %v1061 = vpop.f32.mrb[0].mxu0
      %v1062 = vadd.f32 %v877, %v1061
      %v1063 = vpop.f32.mrb[0].mxu0
      %1064 = vmatprep.mubr.f32.mxu0 0.0
      %v1065 = vand.u32 %v346, 4294901760
      %v1066 = vsub.f32 %v346, %v1065
      %v1067 = vand.u32 %v1066, 4294901760
      %1068 = vmatmul.mubr.f32.gmra.mrb[0].mxu0 %v1067
      %v1069 = vpop.f32.mrb[0].mxu0
      %v1070 = vadd.f32 %v884, %v1069
      %v1071 = vpop.f32.mrb[0].mxu0
      %1072 = vmatprep.mubr.f32.mxu0 0.0
      %v1073 = vand.u32 %v349, 4294901760
      %v1074 = vsub.f32 %v349, %v1073
      %v1075 = vand.u32 %v1074, 4294901760
      %1076 = vmatmul.mubr.f32.gmra.mrb[0].mxu0 %v1075
      %v1077 = vpop.f32.mrb[0].mxu0
      %v1078 = vadd.f32 %v891, %v1077
      %v1079 = vpop.f32.mrb[0].mxu0
      %1080 = vmatprep.mubr.f32.mxu0 0.0
      %v1081 = vand.u32 %v352, 4294901760
      %v1082 = vsub.f32 %v352, %v1081
      %v1083 = vand.u32 %v1082, 4294901760
      %1084 = vmatmul.mubr.f32.gmra.mrb[0].mxu0 %v1083
      %v1085 = vpop.f32.mrb[0].mxu0
      %v1086 = vadd.f32 %v898, %v1085
      %v1087 = vpop.f32.mrb[0].mxu0
      %1088 = vmatprep.mubr.f32.mxu0 0.0
      %v1089 = vand.u32 %v355, 4294901760
      %v1090 = vsub.f32 %v355, %v1089
      %v1091 = vand.u32 %v1090, 4294901760
      %1092 = vmatmul.mubr.f32.gmra.mrb[0].mxu0 %v1091
      %v1093 = vpop.f32.mrb[0].mxu0
      %v1094 = vadd.f32 %v905, %v1093
      %v1095 = vpop.f32.mrb[0].mxu0
      %1096 = vmatprep.mubr.f32.mxu0 0.0
      %v1097 = vand.u32 %v358, 4294901760
      %v1098 = vsub.f32 %v358, %v1097
      %v1099 = vand.u32 %v1098, 4294901760
      %1100 = vmatmul.mubr.f32.gmra.mrb[0].mxu0 %v1099
      %v1101 = vpop.f32.mrb[0].mxu0
      %v1102 = vadd.f32 %v912, %v1101
      %v1103 = vpop.f32.mrb[0].mxu0
      %1104 = vmatprep.mubr.f32.mxu0 0.0
      %v1105 = vand.u32 %v361, 4294901760
      %v1106 = vsub.f32 %v361, %v1105
      %v1107 = vand.u32 %v1106, 4294901760
      %1108 = vmatmul.mubr.f32.gmra.mrb[0].mxu0 %v1107
      %v1109 = vpop.f32.mrb[0].mxu0
      %v1110 = vadd.f32 %v919, %v1109
      %v1111 = vpop.f32.mrb[0].mxu0
      %1112 = vmatprep.mubr.f32.mxu0 0.0
      %v1113 = vand.u32 %v364, 4294901760
      %v1114 = vsub.f32 %v364, %v1113
      %v1115 = vand.u32 %v1114, 4294901760
      %1116 = vmatmul.mubr.f32.gmra.mrb[0].mxu0 %v1115
      %v1117 = vpop.f32.mrb[0].mxu0
      %v1118 = vadd.f32 %v926, %v1117
      %v1119 = vpop.f32.mrb[0].mxu0
      %1120 = vmatprep.mubr.f32.mxu0 0.0
      %v1121 = vand.u32 %v367, 4294901760
      %v1122 = vsub.f32 %v367, %v1121
      %v1123 = vand.u32 %v1122, 4294901760
      %1124 = vmatmul.mubr.f32.gmra.mrb[0].mxu0 %v1123
      %v1125 = vpop.f32.mrb[0].mxu0
      %v1126 = vadd.f32 %v933, %v1125
      %v1127 = vpop.f32.mrb[0].mxu0
      %1128 = vmatprep.mubr.f32.mxu0 0.0
      %v1129 = vand.u32 %v370, 4294901760
      %v1130 = vsub.f32 %v370, %v1129
      %v1131 = vand.u32 %v1130, 4294901760
      %1132 = vmatmul.mubr.f32.gmra.mrb[0].mxu0 %v1131
      %v1133 = vpop.f32.mrb[0].mxu0
      %v1134 = vadd.f32 %v940, %v1133
      %v1135 = vpop.f32.mrb[0].mxu0
      %1136 = vdwg.mxu0
      %1137 = vmatprep.subr.mxu0 0.0
      %v1138 = vand.u32 %v290, 4294901760
      %v1139 = vsub.f32 %v290, %v1138
      %v1140 = vand.u32 %v1139, 4294901760
      %1141 = vmatpush1.msra.mxu0 %v1140
      %1142 = vmatprep.subr.mxu0 0.0
      %1143 = vmatpush1.msra.mxu0 0.0
      %1144 = vmatprep.subr.mxu0 0.0
      %1145 = vmatpush1.msra.mxu0 0.0
      %1146 = vmatprep.subr.mxu0 0.0
      %1147 = vmatpush1.msra.mxu0 0.0
      %1148 = vmatprep.subr.mxu0 0.0
      %1149 = vmatpush1.msra.mxu0 0.0
      %1150 = vmatprep.subr.mxu0 0.0
      %1151 = vmatpush1.msra.mxu0 0.0
      %1152 = vmatprep.subr.mxu0 0.0
      %1153 = vmatpush1.msra.mxu0 0.0
      %1154 = vmatprep.subr.mxu0 0.0
      %1155 = vmatpush1.msra.mxu0 0.0
      %1156 = vmatprep.subr.mxu0 0.0
      %1157 = vmatpush1.msra.mxu0 0.0
      %1158 = vmatprep.subr.mxu0 0.0
      %1159 = vmatpush1.msra.mxu0 0.0
      %1160 = vmatprep.subr.mxu0 0.0
      %1161 = vmatpush1.msra.mxu0 0.0
      %1162 = vmatprep.subr.mxu0 0.0
      %1163 = vmatpush1.msra.mxu0 0.0
      %1164 = vmatprep.subr.mxu0 0.0
      %1165 = vmatpush1.msra.mxu0 0.0
      %1166 = vmatprep.subr.mxu0 0.0
      %1167 = vmatpush1.msra.mxu0 0.0
      %1168 = vmatprep.subr.mxu0 0.0
      %1169 = vmatpush1.msra.mxu0 0.0
      %1170 = vmatprep.subr.mxu0 0.0
      %1171 = vmatpush1.msra.mxu0 0.0
      %1172 = vmatprep.subr.mxu0 0.0
      %1173 = vmatpush1.msra.mxu0 0.0
      %1174 = vmatprep.subr.mxu0 0.0
      %1175 = vmatpush1.msra.mxu0 0.0
      %1176 = vmatprep.subr.mxu0 0.0
      %1177 = vmatpush1.msra.mxu0 0.0
      %1178 = vmatprep.subr.mxu0 0.0
      %1179 = vmatpush1.msra.mxu0 0.0
      %1180 = vmatprep.subr.mxu0 0.0
      %1181 = vmatpush1.msra.mxu0 0.0
      %1182 = vmatprep.subr.mxu0 0.0
      %1183 = vmatpush1.msra.mxu0 0.0
      %1184 = vmatprep.subr.mxu0 0.0
      %1185 = vmatpush1.msra.mxu0 0.0
      %1186 = vmatprep.subr.mxu0 0.0
      %1187 = vmatpush1.msra.mxu0 0.0
      %1188 = vmatprep.subr.mxu0 0.0
      %1189 = vmatpush1.msra.mxu0 0.0
      %1190 = vmatprep.subr.mxu0 0.0
      %1191 = vmatpush1.msra.mxu0 0.0
      %1192 = vmatprep.subr.mxu0 0.0
      %1193 = vmatpush1.msra.mxu0 0.0
      %1194 = vmatprep.subr.mxu0 0.0
      %1195 = vmatpush1.msra.mxu0 0.0
      %1196 = vmatprep.subr.mxu0 0.0
      %1197 = vmatpush1.msra.mxu0 0.0
      %1198 = vmatprep.subr.mxu0 0.0
      %1199 = vmatpush1.msra.mxu0 0.0
      %1200 = vmatprep.subr.mxu0 0.0
      %1201 = vmatpush1.msra.mxu0 0.0
      %1202 = vmatprep.subr.mxu0 0.0
      %1203 = vmatpush1.msra.mxu0 0.0
      %1204 = vmatprep.mubr.f32.mxu0 0.0
      %v1205 = vand.u32 %v325, 4294901760
      %1206 = vmatmul.mubr.f32.gmra.mrb[0].mxu0 %v1205
      %v1207 = vpop.f32.mrb[0].mxu0
      %v1208 = vadd.f32 %v1014, %v1207
      %v1209 = vpop.f32.mrb[0].mxu0
      %1210 = vmatprep.mubr.f32.mxu0 0.0
      %v1211 = vand.u32 %v328, 4294901760
      %1212 = vmatmul.mubr.f32.gmra.mrb[0].mxu0 %v1211
      %v1213 = vpop.f32.mrb[0].mxu0
      %v1214 = vadd.f32 %v1022, %v1213
      %v1215 = vpop.f32.mrb[0].mxu0
      %1216 = vmatprep.mubr.f32.mxu0 0.0
      %v1217 = vand.u32 %v331, 4294901760
      %1218 = vmatmul.mubr.f32.gmra.mrb[0].mxu0 %v1217
      %v1219 = vpop.f32.mrb[0].mxu0
      %v1220 = vadd.f32 %v1030, %v1219
      %v1221 = vpop.f32.mrb[0].mxu0
      %1222 = vmatprep.mubr.f32.mxu0 0.0
      %v1223 = vand.u32 %v334, 4294901760
      %1224 = vmatmul.mubr.f32.gmra.mrb[0].mxu0 %v1223
      %v1225 = vpop.f32.mrb[0].mxu0
      %v1226 = vadd.f32 %v1038, %v1225
      %v1227 = vpop.f32.mrb[0].mxu0
      %1228 = vmatprep.mubr.f32.mxu0 0.0
      %v1229 = vand.u32 %v337, 4294901760
      %1230 = vmatmul.mubr.f32.gmra.mrb[0].mxu0 %v1229
      %v1231 = vpop.f32.mrb[0].mxu0
      %v1232 = vadd.f32 %v1046, %v1231
      %v1233 = vpop.f32.mrb[0].mxu0
      %1234 = vmatprep.mubr.f32.mxu0 0.0
      %v1235 = vand.u32 %v340, 4294901760
      %1236 = vmatmul.mubr.f32.gmra.mrb[0].mxu0 %v1235
      %v1237 = vpop.f32.mrb[0].mxu0
      %v1238 = vadd.f32 %v1054, %v1237
      %v1239 = vpop.f32.mrb[0].mxu0
      %1240 = vmatprep.mubr.f32.mxu0 0.0
      %v1241 = vand.u32 %v343, 4294901760
      %1242 = vmatmul.mubr.f32.gmra.mrb[0].mxu0 %v1241
      %v1243 = vpop.f32.mrb[0].mxu0
      %v1244 = vadd.f32 %v1062, %v1243
      %v1245 = vpop.f32.mrb[0].mxu0
      %1246 = vmatprep.mubr.f32.mxu0 0.0
      %v1247 = vand.u32 %v346, 4294901760
      %1248 = vmatmul.mubr.f32.gmra.mrb[0].mxu0 %v1247
      %v1249 = vpop.f32.mrb[0].mxu0
      %v1250 = vadd.f32 %v1070, %v1249
      %v1251 = vpop.f32.mrb[0].mxu0
      %1252 = vmatprep.mubr.f32.mxu0 0.0
      %v1253 = vand.u32 %v349, 4294901760
      %1254 = vmatmul.mubr.f32.gmra.mrb[0].mxu0 %v1253
      %v1255 = vpop.f32.mrb[0].mxu0
      %v1256 = vadd.f32 %v1078, %v1255
      %v1257 = vpop.f32.mrb[0].mxu0
      %1258 = vmatprep.mubr.f32.mxu0 0.0
      %v1259 = vand.u32 %v352, 4294901760
      %1260 = vmatmul.mubr.f32.gmra.mrb[0].mxu0 %v1259
      %v1261 = vpop.f32.mrb[0].mxu0
      %v1262 = vadd.f32 %v1086, %v1261
      %v1263 = vpop.f32.mrb[0].mxu0
      %1264 = vmatprep.mubr.f32.mxu0 0.0
      %v1265 = vand.u32 %v355, 4294901760
      %1266 = vmatmul.mubr.f32.gmra.mrb[0].mxu0 %v1265
      %v1267 = vpop.f32.mrb[0].mxu0
      %v1268 = vadd.f32 %v1094, %v1267
      %v1269 = vpop.f32.mrb[0].mxu0
      %1270 = vmatprep.mubr.f32.mxu0 0.0
      %v1271 = vand.u32 %v358, 4294901760
      %1272 = vmatmul.mubr.f32.gmra.mrb[0].mxu0 %v1271
      %v1273 = vpop.f32.mrb[0].mxu0
      %v1274 = vadd.f32 %v1102, %v1273
      %v1275 = vpop.f32.mrb[0].mxu0
      %1276 = vmatprep.mubr.f32.mxu0 0.0
      %v1277 = vand.u32 %v361, 4294901760
      %1278 = vmatmul.mubr.f32.gmra.mrb[0].mxu0 %v1277
      %v1279 = vpop.f32.mrb[0].mxu0
      %v1280 = vadd.f32 %v1110, %v1279
      %v1281 = vpop.f32.mrb[0].mxu0
      %1282 = vmatprep.mubr.f32.mxu0 0.0
      %v1283 = vand.u32 %v364, 4294901760
      %1284 = vmatmul.mubr.f32.gmra.mrb[0].mxu0 %v1283
      %v1285 = vpop.f32.mrb[0].mxu0
      %v1286 = vadd.f32 %v1118, %v1285
      %v1287 = vpop.f32.mrb[0].mxu0
      %1288 = vmatprep.mubr.f32.mxu0 0.0
      %v1289 = vand.u32 %v367, 4294901760
      %1290 = vmatmul.mubr.f32.gmra.mrb[0].mxu0 %v1289
      %v1291 = vpop.f32.mrb[0].mxu0
      %v1292 = vadd.f32 %v1126, %v1291
      %v1293 = vpop.f32.mrb[0].mxu0
      %1294 = vmatprep.mubr.f32.mxu0 0.0
      %v1295 = vand.u32 %v370, 4294901760
      %1296 = vmatmul.mubr.f32.gmra.mrb[0].mxu0 %v1295
      %v1297 = vpop.f32.mrb[0].mxu0
      %v1298 = vadd.f32 %v1134, %v1297
      %v1299 = vpop.f32.mrb[0].mxu0
      %1300 = vdwg.mxu0
      %1301 = vmatprep.subr.mxu0 0.0
      %v1302 = vand.u32 %v290, 4294901760
      %1303 = vmatpush1.msra.mxu0 %v1302
      %1304 = vmatprep.subr.mxu0 0.0
      %1305 = vmatpush1.msra.mxu0 0.0
      %1306 = vmatprep.subr.mxu0 0.0
      %1307 = vmatpush1.msra.mxu0 0.0
      %1308 = vmatprep.subr.mxu0 0.0
      %1309 = vmatpush1.msra.mxu0 0.0
      %1310 = vmatprep.subr.mxu0 0.0
      %1311 = vmatpush1.msra.mxu0 0.0
      %1312 = vmatprep.subr.mxu0 0.0
      %1313 = vmatpush1.msra.mxu0 0.0
      %1314 = vmatprep.subr.mxu0 0.0
      %1315 = vmatpush1.msra.mxu0 0.0
      %1316 = vmatprep.subr.mxu0 0.0
      %1317 = vmatpush1.msra.mxu0 0.0
      %1318 = vmatprep.subr.mxu0 0.0
      %1319 = vmatpush1.msra.mxu0 0.0
      %1320 = vmatprep.subr.mxu0 0.0
      %1321 = vmatpush1.msra.mxu0 0.0
      %1322 = vmatprep.subr.mxu0 0.0
      %1323 = vmatpush1.msra.mxu0 0.0
      %1324 = vmatprep.subr.mxu0 0.0
      %1325 = vmatpush1.msra.mxu0 0.0
      %1326 = vmatprep.subr.mxu0 0.0
      %1327 = vmatpush1.msra.mxu0 0.0
      %1328 = vmatprep.subr.mxu0 0.0
      %1329 = vmatpush1.msra.mxu0 0.0
      %1330 = vmatprep.subr.mxu0 0.0
      %1331 = vmatpush1.msra.mxu0 0.0
      %1332 = vmatprep.subr.mxu0 0.0
      %1333 = vmatpush1.msra.mxu0 0.0
      %1334 = vmatprep.subr.mxu0 0.0
      %1335 = vmatpush1.msra.mxu0 0.0
      %1336 = vmatprep.subr.mxu0 0.0
      %1337 = vmatpush1.msra.mxu0 0.0
      %1338 = vmatprep.subr.mxu0 0.0
      %1339 = vmatpush1.msra.mxu0 0.0
      %1340 = vmatprep.subr.mxu0 0.0
      %1341 = vmatpush1.msra.mxu0 0.0
      %1342 = vmatprep.subr.mxu0 0.0
      %1343 = vmatpush1.msra.mxu0 0.0
      %1344 = vmatprep.subr.mxu0 0.0
      %1345 = vmatpush1.msra.mxu0 0.0
      %1346 = vmatprep.subr.mxu0 0.0
      %1347 = vmatpush1.msra.mxu0 0.0
      %1348 = vmatprep.subr.mxu0 0.0
      %1349 = vmatpush1.msra.mxu0 0.0
      %1350 = vmatprep.subr.mxu0 0.0
      %1351 = vmatpush1.msra.mxu0 0.0
      %1352 = vmatprep.subr.mxu0 0.0
      %1353 = vmatpush1.msra.mxu0 0.0
      %1354 = vmatprep.subr.mxu0 0.0
      %1355 = vmatpush1.msra.mxu0 0.0
      %1356 = vmatprep.subr.mxu0 0.0
      %1357 = vmatpush1.msra.mxu0 0.0
      %1358 = vmatprep.subr.mxu0 0.0
      %1359 = vmatpush1.msra.mxu0 0.0
      %1360 = vmatprep.subr.mxu0 0.0
      %1361 = vmatpush1.msra.mxu0 0.0
      %1362 = vmatprep.subr.mxu0 0.0
      %1363 = vmatpush1.msra.mxu0 0.0
      %1364 = vmatprep.subr.mxu0 0.0
      %1365 = vmatpush1.msra.mxu0 0.0
      %1366 = vmatprep.mubr.f32.mxu0 0.0
      %v1367 = vand.u32 %v325, 4294901760
      %1368 = vmatmul.mubr.f32.gmra.mrb[0].mxu0 %v1367
      %v1369 = vpop.f32.mrb[0].mxu0
      %v1370 = vadd.f32 %v1208, %v1369
      %v1371 = vpop.f32.mrb[0].mxu0
      %1372 = vmatprep.mubr.f32.mxu0 0.0
      %v1373 = vand.u32 %v328, 4294901760
      %1374 = vmatmul.mubr.f32.gmra.mrb[0].mxu0 %v1373
      %v1375 = vpop.f32.mrb[0].mxu0
      %v1376 = vadd.f32 %v1214, %v1375
      %v1377 = vpop.f32.mrb[0].mxu0
      %1378 = vmatprep.mubr.f32.mxu0 0.0
      %v1379 = vand.u32 %v331, 4294901760
      %1380 = vmatmul.mubr.f32.gmra.mrb[0].mxu0 %v1379
      %v1381 = vpop.f32.mrb[0].mxu0
      %v1382 = vadd.f32 %v1220, %v1381
      %v1383 = vpop.f32.mrb[0].mxu0
      %1384 = vmatprep.mubr.f32.mxu0 0.0
      %v1385 = vand.u32 %v334, 4294901760
      %1386 = vmatmul.mubr.f32.gmra.mrb[0].mxu0 %v1385
      %v1387 = vpop.f32.mrb[0].mxu0
      %v1388 = vadd.f32 %v1226, %v1387
      %v1389 = vpop.f32.mrb[0].mxu0
      %1390 = vmatprep.mubr.f32.mxu0 0.0
      %v1391 = vand.u32 %v337, 4294901760
      %1392 = vmatmul.mubr.f32.gmra.mrb[0].mxu0 %v1391
      %v1393 = vpop.f32.mrb[0].mxu0
      %v1394 = vadd.f32 %v1232, %v1393
      %v1395 = vpop.f32.mrb[0].mxu0
      %1396 = vmatprep.mubr.f32.mxu0 0.0
      %v1397 = vand.u32 %v340, 4294901760
      %1398 = vmatmul.mubr.f32.gmra.mrb[0].mxu0 %v1397
      %v1399 = vpop.f32.mrb[0].mxu0
      %v1400 = vadd.f32 %v1238, %v1399
      %v1401 = vpop.f32.mrb[0].mxu0
      %1402 = vmatprep.mubr.f32.mxu0 0.0
      %v1403 = vand.u32 %v343, 4294901760
      %1404 = vmatmul.mubr.f32.gmra.mrb[0].mxu0 %v1403
      %v1405 = vpop.f32.mrb[0].mxu0
      %v1406 = vadd.f32 %v1244, %v1405
      %v1407 = vpop.f32.mrb[0].mxu0
      %1408 = vmatprep.mubr.f32.mxu0 0.0
      %v1409 = vand.u32 %v346, 4294901760
      %1410 = vmatmul.mubr.f32.gmra.mrb[0].mxu0 %v1409
      %v1411 = vpop.f32.mrb[0].mxu0
      %v1412 = vadd.f32 %v1250, %v1411
      %v1413 = vpop.f32.mrb[0].mxu0
      %1414 = vmatprep.mubr.f32.mxu0 0.0
      %v1415 = vand.u32 %v349, 4294901760
      %1416 = vmatmul.mubr.f32.gmra.mrb[0].mxu0 %v1415
      %v1417 = vpop.f32.mrb[0].mxu0
      %v1418 = vadd.f32 %v1256, %v1417
      %v1419 = vpop.f32.mrb[0].mxu0
      %1420 = vmatprep.mubr.f32.mxu0 0.0
      %v1421 = vand.u32 %v352, 4294901760
      %1422 = vmatmul.mubr.f32.gmra.mrb[0].mxu0 %v1421
      %v1423 = vpop.f32.mrb[0].mxu0
      %v1424 = vadd.f32 %v1262, %v1423
      %v1425 = vpop.f32.mrb[0].mxu0
      %1426 = vmatprep.mubr.f32.mxu0 0.0
      %v1427 = vand.u32 %v355, 4294901760
      %1428 = vmatmul.mubr.f32.gmra.mrb[0].mxu0 %v1427
      %v1429 = vpop.f32.mrb[0].mxu0
      %v1430 = vadd.f32 %v1268, %v1429
      %v1431 = vpop.f32.mrb[0].mxu0
      %1432 = vmatprep.mubr.f32.mxu0 0.0
      %v1433 = vand.u32 %v358, 4294901760
      %1434 = vmatmul.mubr.f32.gmra.mrb[0].mxu0 %v1433
      %v1435 = vpop.f32.mrb[0].mxu0
      %v1436 = vadd.f32 %v1274, %v1435
      %v1437 = vpop.f32.mrb[0].mxu0
      %1438 = vmatprep.mubr.f32.mxu0 0.0
      %v1439 = vand.u32 %v361, 4294901760
      %1440 = vmatmul.mubr.f32.gmra.mrb[0].mxu0 %v1439
      %v1441 = vpop.f32.mrb[0].mxu0
      %v1442 = vadd.f32 %v1280, %v1441
      %v1443 = vpop.f32.mrb[0].mxu0
      %1444 = vmatprep.mubr.f32.mxu0 0.0
      %v1445 = vand.u32 %v364, 4294901760
      %1446 = vmatmul.mubr.f32.gmra.mrb[0].mxu0 %v1445
      %v1447 = vpop.f32.mrb[0].mxu0
      %v1448 = vadd.f32 %v1286, %v1447
      %v1449 = vpop.f32.mrb[0].mxu0
      %1450 = vmatprep.mubr.f32.mxu0 0.0
      %v1451 = vand.u32 %v367, 4294901760
      %1452 = vmatmul.mubr.f32.gmra.mrb[0].mxu0 %v1451
      %v1453 = vpop.f32.mrb[0].mxu0
      %v1454 = vadd.f32 %v1292, %v1453
      %v1455 = vpop.f32.mrb[0].mxu0
      %1456 = vmatprep.mubr.f32.mxu0 0.0
      %v1457 = vand.u32 %v370, 4294901760
      %1458 = vmatmul.mubr.f32.gmra.mrb[0].mxu0 %v1457
      %v1459 = vpop.f32.mrb[0].mxu0
      %v1460 = vadd.f32 %v1298, %v1459
      %v1461 = vpop.f32.mrb[0].mxu0
      %1462 = vdwg.mxu0
      %v1463 = vld [vmem:[#allocation4] sm:$0xff]
      %v1464 = vld [vmem:[#allocation4 + $0x8] sm:$0xff]
      %v1465 = vld [vmem:[#allocation4 + $0x10] sm:$0xff]
      %v1466 = vld [vmem:[#allocation4 + $0x18] sm:$0xff]
      %v1467 = vld [vmem:[#allocation4 + $0x20] sm:$0xff]
      %v1468 = vld [vmem:[#allocation4 + $0x28] sm:$0xff]
      %v1469 = vld [vmem:[#allocation4 + $0x30] sm:$0xff]
      %v1470 = vld [vmem:[#allocation4 + $0x38] sm:$0xff]
      %v1471 = vld [vmem:[#allocation4 + $0x40] sm:$0xff]
      %v1472 = vld [vmem:[#allocation4 + $0x48] sm:$0xff]
      %v1473 = vld [vmem:[#allocation4 + $0x50] sm:$0xff]
      %v1474 = vld [vmem:[#allocation4 + $0x58] sm:$0xff]
      %v1475 = vld [vmem:[#allocation4 + $0x60] sm:$0xff]
      %v1476 = vld [vmem:[#allocation4 + $0x68] sm:$0xff]
      %v1477 = vld [vmem:[#allocation4 + $0x70] sm:$0xff]
      %v1478 = vld [vmem:[#allocation4 + $0x78] sm:$0xff]
      %1479 = vmin.xlane.f32.xlu0 %v1370
      %v1480 = vpop.xlane.xlu0 %1479
      %1481 = vmin.xlane.f32.xlu0 %v1376
      %v1482 = vpop.xlane.xlu0 %1481
      %1483 = vmin.xlane.f32.xlu0 %v1382
      %v1484 = vpop.xlane.xlu0 %1483
      %1485 = vmin.xlane.f32.xlu0 %v1388
      %v1486 = vpop.xlane.xlu0 %1485
      %1487 = vmin.xlane.f32.xlu0 %v1394
      %v1488 = vpop.xlane.xlu0 %1487
      %1489 = vmin.xlane.f32.xlu0 %v1400
      %v1490 = vpop.xlane.xlu0 %1489
      %1491 = vmin.xlane.f32.xlu0 %v1406
      %v1492 = vpop.xlane.xlu0 %1491
      %1493 = vmin.xlane.f32.xlu0 %v1412
      %v1494 = vpop.xlane.xlu0 %1493
      %1495 = vmin.xlane.f32.xlu0 %v1418
      %v1496 = vpop.xlane.xlu0 %1495
      %1497 = vmin.xlane.f32.xlu0 %v1424
      %v1498 = vpop.xlane.xlu0 %1497
      %1499 = vmin.xlane.f32.xlu0 %v1430
      %v1500 = vpop.xlane.xlu0 %1499
      %1501 = vmin.xlane.f32.xlu0 %v1436
      %v1502 = vpop.xlane.xlu0 %1501
      %1503 = vmin.xlane.f32.xlu0 %v1442
      %v1504 = vpop.xlane.xlu0 %1503
      %1505 = vmin.xlane.f32.xlu0 %v1448
      %v1506 = vpop.xlane.xlu0 %1505
      %1507 = vmin.xlane.f32.xlu0 %v1454
      %v1508 = vpop.xlane.xlu0 %1507
      %1509 = vmin.xlane.f32.xlu0 %v1460
      %v1510 = vpop.xlane.xlu0 %1509
      %v1511 = vmin.f32 %v1463, %v1480
      %v1512 = vmin.f32 %v1464, %v1482
      %v1513 = vmin.f32 %v1465, %v1484
      %v1514 = vmin.f32 %v1466, %v1486
      %v1515 = vmin.f32 %v1467, %v1488
      %v1516 = vmin.f32 %v1468, %v1490
      %v1517 = vmin.f32 %v1469, %v1492
      %v1518 = vmin.f32 %v1470, %v1494
      %v1519 = vmin.f32 %v1471, %v1496
      %v1520 = vmin.f32 %v1472, %v1498
      %v1521 = vmin.f32 %v1473, %v1500
      %v1522 = vmin.f32 %v1474, %v1502
      %v1523 = vmin.f32 %v1475, %v1504
      %v1524 = vmin.f32 %v1476, %v1506
      %v1525 = vmin.f32 %v1477, %v1508
      %v1526 = vmin.f32 %v1478, %v1510
      %vm1527 = vcmask 7168
      %1528 = vst.msk [vmem:[#allocation4] sm:$0xff] %vm1527, %v1511
      %1529 = vst.msk [vmem:[#allocation4 + $0x8] sm:$0xff] %vm1527, %v1512
      %1530 = vst.msk [vmem:[#allocation4 + $0x10] sm:$0xff] %vm1527, %v1513
      %1531 = vst.msk [vmem:[#allocation4 + $0x18] sm:$0xff] %vm1527, %v1514
      %1532 = vst.msk [vmem:[#allocation4 + $0x20] sm:$0xff] %vm1527, %v1515
      %1533 = vst.msk [vmem:[#allocation4 + $0x28] sm:$0xff] %vm1527, %v1516
      %1534 = vst.msk [vmem:[#allocation4 + $0x30] sm:$0xff] %vm1527, %v1517
      %1535 = vst.msk [vmem:[#allocation4 + $0x38] sm:$0xff] %vm1527, %v1518
      %1536 = vst.msk [vmem:[#allocation4 + $0x40] sm:$0xff] %vm1527, %v1519
      %1537 = vst.msk [vmem:[#allocation4 + $0x48] sm:$0xff] %vm1527, %v1520
      %1538 = vst.msk [vmem:[#allocation4 + $0x50] sm:$0xff] %vm1527, %v1521
      %1539 = vst.msk [vmem:[#allocation4 + $0x58] sm:$0xff] %vm1527, %v1522
      %1540 = vst.msk [vmem:[#allocation4 + $0x60] sm:$0xff] %vm1527, %v1523
      %1541 = vst.msk [vmem:[#allocation4 + $0x68] sm:$0xff] %vm1527, %v1524
      %1542 = vst.msk [vmem:[#allocation4 + $0x70] sm:$0xff] %vm1527, %v1525
      %1543 = vst.msk [vmem:[#allocation4 + $0x78] sm:$0xff] %vm1527, %v1526
      %s1544 = scalar_lea.vmem [#allocation5], %s287
      %v1545 = vld [vmem:[%s1544] sm:$0x1]
      %v1546 = vmin.f32 %v1370, %v1394
      %v1547 = vmin.f32 %v1376, %v1400
      %v1548 = vmin.f32 %v1382, %v1406
      %v1549 = vmin.f32 %v1388, %v1412
      %v1550 = vmin.f32 %v1546, %v1418
      %v1551 = vmin.f32 %v1547, %v1424
      %v1552 = vmin.f32 %v1548, %v1430
      %v1553 = vmin.f32 %v1549, %v1436
      %v1554 = vmin.f32 %v1550, %v1442
      %v1555 = vmin.f32 %v1551, %v1448
      %v1556 = vmin.f32 %v1552, %v1454
      %v1557 = vmin.f32 %v1553, %v1460
      %v1558 = vmin.f32 %v1554, %v1555
      %v1559 = vmin.f32 %v1556, %v1557
      %v1560 = vmin.f32 %v1558, %v1559
      %v1561 = vrot.slane %v1560, 4
      %v1562 = vmin.f32 %v1560, %v1561
      %v1563 = vrot.slane %v1562, 2
      %v1564 = vmin.f32 %v1562, %v1563
      %v1565 = vrot.slane %v1564, 1
      %v1566 = vmin.f32 %v1564, %v1565
      %v1567 = vmin.f32 %v1545, %v1566
      %1568 = vst [vmem:[%s1544] sm:$0x1] %v1567
      // Predicated region
      $region37: #{chamfer_loss_brute_nosigma.1} parent=27 // pred_check
        %p1569 = pneg %p185
      $region38: #{chamfer_loss_brute_nosigma.1} parent=27 // pred_check_branch
        %1571 = sbr.rel (%p1569) target = $region40
      $region39: #{chamfer_loss_brute_nosigma.1} parent=27 // pred_region
        %v1572 = vld [vmem:[#allocation4] sm:$0xff]
        %v1573 = vld [vmem:[#allocation4 + $0x8] sm:$0xff]
        %v1574 = vld [vmem:[#allocation4 + $0x10] sm:$0xff]
        %v1575 = vld [vmem:[#allocation4 + $0x18] sm:$0xff]
        %v1576 = vld [vmem:[#allocation4 + $0x20] sm:$0xff]
        %v1577 = vld [vmem:[#allocation4 + $0x28] sm:$0xff]
        %v1578 = vld [vmem:[#allocation4 + $0x30] sm:$0xff]
        %v1579 = vld [vmem:[#allocation4 + $0x38] sm:$0xff]
        %v1580 = vld [vmem:[#allocation4 + $0x40] sm:$0xff]
        %v1581 = vld [vmem:[#allocation4 + $0x48] sm:$0xff]
        %v1582 = vld [vmem:[#allocation4 + $0x50] sm:$0xff]
        %v1583 = vld [vmem:[#allocation4 + $0x58] sm:$0xff]
        %v1584 = vld [vmem:[#allocation4 + $0x60] sm:$0xff]
        %v1585 = vld [vmem:[#allocation4 + $0x68] sm:$0xff]
        %v1586 = vld [vmem:[#allocation4 + $0x70] sm:$0xff]
        %v1587 = vld [vmem:[#allocation4 + $0x78] sm:$0xff]
        %v1588 = vmax.f32 %v1572, 0.0
        %v1589 = vmax.f32 %v1573, 0.0
        %v1590 = vmax.f32 %v1574, 0.0
        %v1591 = vmax.f32 %v1575, 0.0
        %v1592 = vmax.f32 %v1576, 0.0
        %v1593 = vmax.f32 %v1577, 0.0
        %v1594 = vmax.f32 %v1578, 0.0
        %v1595 = vmax.f32 %v1579, 0.0
        %v1596 = vmax.f32 %v1580, 0.0
        %v1597 = vmax.f32 %v1581, 0.0
        %v1598 = vmax.f32 %v1582, 0.0
        %v1599 = vmax.f32 %v1583, 0.0
        %v1600 = vmax.f32 %v1584, 0.0
        %v1601 = vmax.f32 %v1585, 0.0
        %v1602 = vmax.f32 %v1586, 0.0
        %v1603 = vmax.f32 %v1587, 0.0
        %v1604 = vrsqrt.pop %v1588
        %v1605 = vmul.f32 %v1588, %v1604
        %vm1606 = vcmp.eq.f32.partialorder %v1588, inf
        %v1607 = vsel %vm1606, %v1588, %v1605
        %vm1608 = vcmp.eq.f32.partialorder %v1588, 0.0
        %v1609 = vand.u32 %v1588, 2147483648
        %v1610 = vsel %vm1608, %v1609, %v1607
        %v1611 = vrsqrt.pop %v1589
        %v1612 = vmul.f32 %v1589, %v1611
        %vm1613 = vcmp.eq.f32.partialorder %v1589, inf
        %v1614 = vsel %vm1613, %v1589, %v1612
        %vm1615 = vcmp.eq.f32.partialorder %v1589, 0.0
        %v1616 = vand.u32 %v1589, 2147483648
        %v1617 = vsel %vm1615, %v1616, %v1614
        %v1618 = vrsqrt.pop %v1590
        %v1619 = vmul.f32 %v1590, %v1618
        %vm1620 = vcmp.eq.f32.partialorder %v1590, inf
        %v1621 = vsel %vm1620, %v1590, %v1619
        %vm1622 = vcmp.eq.f32.partialorder %v1590, 0.0
        %v1623 = vand.u32 %v1590, 2147483648
        %v1624 = vsel %vm1622, %v1623, %v1621
        %v1625 = vrsqrt.pop %v1591
        %v1626 = vmul.f32 %v1591, %v1625
        %vm1627 = vcmp.eq.f32.partialorder %v1591, inf
        %v1628 = vsel %vm1627, %v1591, %v1626
        %vm1629 = vcmp.eq.f32.partialorder %v1591, 0.0
        %v1630 = vand.u32 %v1591, 2147483648
        %v1631 = vsel %vm1629, %v1630, %v1628
        %v1632 = vrsqrt.pop %v1592
        %v1633 = vmul.f32 %v1592, %v1632
        %vm1634 = vcmp.eq.f32.partialorder %v1592, inf
        %v1635 = vsel %vm1634, %v1592, %v1633
        %vm1636 = vcmp.eq.f32.partialorder %v1592, 0.0
        %v1637 = vand.u32 %v1592, 2147483648
        %v1638 = vsel %vm1636, %v1637, %v1635
        %v1639 = vrsqrt.pop %v1593
        %v1640 = vmul.f32 %v1593, %v1639
        %vm1641 = vcmp.eq.f32.partialorder %v1593, inf
        %v1642 = vsel %vm1641, %v1593, %v1640
        %vm1643 = vcmp.eq.f32.partialorder %v1593, 0.0
        %v1644 = vand.u32 %v1593, 2147483648
        %v1645 = vsel %vm1643, %v1644, %v1642
        %v1646 = vrsqrt.pop %v1594
        %v1647 = vmul.f32 %v1594, %v1646
        %vm1648 = vcmp.eq.f32.partialorder %v1594, inf
        %v1649 = vsel %vm1648, %v1594, %v1647
        %vm1650 = vcmp.eq.f32.partialorder %v1594, 0.0
        %v1651 = vand.u32 %v1594, 2147483648
        %v1652 = vsel %vm1650, %v1651, %v1649
        %v1653 = vrsqrt.pop %v1595
        %v1654 = vmul.f32 %v1595, %v1653
        %vm1655 = vcmp.eq.f32.partialorder %v1595, inf
        %v1656 = vsel %vm1655, %v1595, %v1654
        %vm1657 = vcmp.eq.f32.partialorder %v1595, 0.0
        %v1658 = vand.u32 %v1595, 2147483648
        %v1659 = vsel %vm1657, %v1658, %v1656
        %v1660 = vrsqrt.pop %v1596
        %v1661 = vmul.f32 %v1596, %v1660
        %vm1662 = vcmp.eq.f32.partialorder %v1596, inf
        %v1663 = vsel %vm1662, %v1596, %v1661
        %vm1664 = vcmp.eq.f32.partialorder %v1596, 0.0
        %v1665 = vand.u32 %v1596, 2147483648
        %v1666 = vsel %vm1664, %v1665, %v1663
        %v1667 = vrsqrt.pop %v1597
        %v1668 = vmul.f32 %v1597, %v1667
        %vm1669 = vcmp.eq.f32.partialorder %v1597, inf
        %v1670 = vsel %vm1669, %v1597, %v1668
        %vm1671 = vcmp.eq.f32.partialorder %v1597, 0.0
        %v1672 = vand.u32 %v1597, 2147483648
        %v1673 = vsel %vm1671, %v1672, %v1670
        %v1674 = vrsqrt.pop %v1598
        %v1675 = vmul.f32 %v1598, %v1674
        %vm1676 = vcmp.eq.f32.partialorder %v1598, inf
        %v1677 = vsel %vm1676, %v1598, %v1675
        %vm1678 = vcmp.eq.f32.partialorder %v1598, 0.0
        %v1679 = vand.u32 %v1598, 2147483648
        %v1680 = vsel %vm1678, %v1679, %v1677
        %v1681 = vrsqrt.pop %v1599
        %v1682 = vmul.f32 %v1599, %v1681
        %vm1683 = vcmp.eq.f32.partialorder %v1599, inf
        %v1684 = vsel %vm1683, %v1599, %v1682
        %vm1685 = vcmp.eq.f32.partialorder %v1599, 0.0
        %v1686 = vand.u32 %v1599, 2147483648
        %v1687 = vsel %vm1685, %v1686, %v1684
        %v1688 = vrsqrt.pop %v1600
        %v1689 = vmul.f32 %v1600, %v1688
        %vm1690 = vcmp.eq.f32.partialorder %v1600, inf
        %v1691 = vsel %vm1690, %v1600, %v1689
        %vm1692 = vcmp.eq.f32.partialorder %v1600, 0.0
        %v1693 = vand.u32 %v1600, 2147483648
        %v1694 = vsel %vm1692, %v1693, %v1691
        %v1695 = vrsqrt.pop %v1601
        %v1696 = vmul.f32 %v1601, %v1695
        %vm1697 = vcmp.eq.f32.partialorder %v1601, inf
        %v1698 = vsel %vm1697, %v1601, %v1696
        %vm1699 = vcmp.eq.f32.partialorder %v1601, 0.0
        %v1700 = vand.u32 %v1601, 2147483648
        %v1701 = vsel %vm1699, %v1700, %v1698
        %v1702 = vrsqrt.pop %v1602
        %v1703 = vmul.f32 %v1602, %v1702
        %vm1704 = vcmp.eq.f32.partialorder %v1602, inf
        %v1705 = vsel %vm1704, %v1602, %v1703
        %vm1706 = vcmp.eq.f32.partialorder %v1602, 0.0
        %v1707 = vand.u32 %v1602, 2147483648
        %v1708 = vsel %vm1706, %v1707, %v1705
        %v1709 = vrsqrt.pop %v1603
        %v1710 = vmul.f32 %v1603, %v1709
        %vm1711 = vcmp.eq.f32.partialorder %v1603, inf
        %v1712 = vsel %vm1711, %v1603, %v1710
        %vm1713 = vcmp.eq.f32.partialorder %v1603, 0.0
        %v1714 = vand.u32 %v1603, 2147483648
        %v1715 = vsel %vm1713, %v1714, %v1712
        %v1716 = vld [vmem:[#allocation2] sm:$0x1]
        %v1717 = vsel %vm1527, %v1610, 0.0
        %v1718 = vsel %vm1527, %v1617, 0.0
        %v1719 = vadd.f32 %v1717, %v1718
        %v1720 = vsel %vm1527, %v1624, 0.0
        %v1721 = vadd.f32 %v1719, %v1720
        %v1722 = vsel %vm1527, %v1631, 0.0
        %v1723 = vadd.f32 %v1721, %v1722
        %v1724 = vsel %vm1527, %v1638, 0.0
        %v1725 = vadd.f32 %v1723, %v1724
        %v1726 = vsel %vm1527, %v1645, 0.0
        %v1727 = vadd.f32 %v1725, %v1726
        %v1728 = vsel %vm1527, %v1652, 0.0
        %v1729 = vadd.f32 %v1727, %v1728
        %v1730 = vsel %vm1527, %v1659, 0.0
        %v1731 = vadd.f32 %v1729, %v1730
        %v1732 = vsel %vm1527, %v1666, 0.0
        %v1733 = vadd.f32 %v1731, %v1732
        %v1734 = vsel %vm1527, %v1673, 0.0
        %v1735 = vadd.f32 %v1733, %v1734
        %v1736 = vsel %vm1527, %v1680, 0.0
        %v1737 = vadd.f32 %v1735, %v1736
        %v1738 = vsel %vm1527, %v1687, 0.0
        %v1739 = vadd.f32 %v1737, %v1738
        %v1740 = vsel %vm1527, %v1694, 0.0
        %v1741 = vadd.f32 %v1739, %v1740
        %v1742 = vsel %vm1527, %v1701, 0.0
        %v1743 = vadd.f32 %v1741, %v1742
        %v1744 = vsel %vm1527, %v1708, 0.0
        %v1745 = vadd.f32 %v1743, %v1744
        %v1746 = vsel %vm1527, %v1715, 0.0
        %v1747 = vadd.f32 %v1745, %v1746
        %v1748 = vrot.slane %v1747, 4
        %v1749 = vadd.f32 %v1747, %v1748
        %v1750 = vrot.slane %v1749, 2
        %v1751 = vadd.f32 %v1749, %v1750
        %v1752 = vrot.slane %v1751, 1
        %v1753 = vadd.f32 %v1751, %v1752
        %v1754 = vadd.f32 %v1716, %v1753
        %vm1755 = vcmask 0
        %1756 = vst.msk [vmem:[#allocation2] sm:$0x1] %vm1755, %v1754
      $region40: #{chamfer_loss_brute_nosigma.1} parent=27 // pred_fallthru
        _
      // Predicated region
      $region41: #{chamfer_loss_brute_nosigma.1} parent=27 // pred_check
        %p1757 = pneg %p184
      $region42: #{chamfer_loss_brute_nosigma.1} parent=27 // pred_check_branch
        %1759 = sbr.rel (%p1757) target = $region44
      $region43: #{chamfer_loss_brute_nosigma.1} parent=27 // pred_region
        %v1760 = vld [vmem:[%s1544] sm:$0x1]
        %v1761 = vmax.f32 %v1760, 0.0
        %v1762 = vrsqrt.pop %v1761
        %v1763 = vmul.f32 %v1761, %v1762
        %vm1764 = vcmp.eq.f32.partialorder %v1761, inf
        %v1765 = vsel %vm1764, %v1761, %v1763
        %vm1766 = vcmp.eq.f32.partialorder %v1761, 0.0
        %v1767 = vand.u32 %v1761, 2147483648
        %v1768 = vsel %vm1766, %v1767, %v1765
        %v1769 = vlaneseq
        %v1770 = vand.u32 %v1769, 127
        %v1771 = vstv %s285
        %v1772 = vadd.s32 %v1771, %v1770
        %vm1773 = vcmp.lt.s32.totalorder %v1772, 64
        %v1774 = vsel %vm1773, %v1768, 0.0
        %v1775 = vld [vmem:[#allocation3] sm:$0x1]
        %vm1776 = vcmask 1040384
        %v1777 = vsel %vm1776, %v1774, 0.0
        %1778 = vadd.xlane.f32.xlu0 %v1777
        %v1779 = vpop.xlane.xlu0 %1778
        %v1780 = vadd.f32 %v1775, %v1779
        %vm1781 = vcmask 0
        %1782 = vst.msk [vmem:[#allocation3] sm:$0x1] %vm1781, %v1780
      $region44: #{chamfer_loss_brute_nosigma.1} parent=27 // pred_fallthru
        _
      // Predicated region
      $region45: #{chamfer_loss_brute_nosigma.1} parent=27 // pred_check
        _
      $region46: #{chamfer_loss_brute_nosigma.1} parent=27 // pred_check_branch
        %1784 = sbr.rel (%p186) target = $region48
      $region47: #{chamfer_loss_brute_nosigma.1} parent=27 // pred_region
        %v1785 = vlaneseq
        %v1786 = vand.u32 %v1785, 127
        %vm1787 = vcmp.eq.s32.totalorder %v1786, 0
        %v1788 = vld [vmem:[#allocation2] sm:$0x1]
        %vm1789 = vcmp.eq.s32.totalorder %v1786, 1
        %v1790 = vld [vmem:[#allocation3] sm:$0x1]
        %1792 = vset.pattern.permute.xlu0 0
        %1793 = vperm.xlu0 %1792, %v1790
        %v1794 = vpop.permute.xlu0 %1793
        %v1796 = vlaneseq
        %v1797 = vshrl.u32 %v1796, 7
        %v1798 = vsub.s32 0, %v1797
        %v1799 = vrot.slane %v1794, %v1798
        %v1800 = vsel %vm1789, %v1799, 0.0
        %1802 = vset.pattern.permute.xlu0 0
        %1803 = vperm.xlu0 %1802, %v1788
        %v1804 = vpop.permute.xlu0 %1803
        %v1806 = vlaneseq
        %v1807 = vshrl.u32 %v1806, 7
        %v1808 = vsub.s32 0, %v1807
        %v1809 = vrot.slane %v1804, %v1808
        %v1810 = vsel %vm1787, %v1809, %v1800
        %1811 = vst [vmem:[%s183] sm:$0x1] %v1810
      $region48: #{chamfer_loss_brute_nosigma.1} parent=27 // pred_fallthru
        _
      %p1812 = scmp.lt.s32.totalorder %s18, 1
      %s1813 = scalar_select %p1812, %s18, 1
      %s1814 = scalar_lea.vmem %s2, %s1813
      // Predicated region
      $region49: #{chamfer_loss_brute_nosigma.1} parent=27 // pred_check
        %p1815 = pneg %p104
      $region50: #{chamfer_loss_brute_nosigma.1} parent=27 // pred_check_branch
        %1817 = sbr.rel (%p1815) target = $region52
      $region51: #{chamfer_loss_brute_nosigma.1} parent=27 // pred_region
        _
      $region52: #{chamfer_loss_brute_nosigma.1} parent=27 // pred_fallthru
        _
    $region28: #{chamfer_loss_brute_nosigma.1} parent=5 // pred_fallthru
      _
    %p1818 = scmp.le.s32.totalorder 2, %s8
    // Predicated region
    $region53: #{chamfer_loss_brute_nosigma.1} parent=5 // pred_check
      %p1819 = pneg %p1818
    $region54: #{chamfer_loss_brute_nosigma.1} parent=5 // pred_check_branch
      %1821 = sbr.rel (%p1819) target = $region56
    $region55: #{chamfer_loss_brute_nosigma.1} parent=5 // pred_region
      %s1822 = ssub.s32 %s8, 2
      // Predicated region
      $region57: #{chamfer_loss_brute_nosigma.1} parent=55 // pred_check
        %p1823 = pneg %p110
      $region58: #{chamfer_loss_brute_nosigma.1} parent=55 // pred_check_branch
        %1825 = sbr.rel (%p1823) target = $region60
      $region59: #{chamfer_loss_brute_nosigma.1} parent=55 // pred_region
        %p1826 = scmp.lt.s32.totalorder %s21, 1
        %s1827 = scalar_select %p1826, %s21, 1
        %s1828 = scalar_lea.vmem %s2, %s1827
      $region60: #{chamfer_loss_brute_nosigma.1} parent=55 // pred_fallthru
        _
    $region56: #{chamfer_loss_brute_nosigma.1} parent=5 // pred_fallthru
      _
  $region6: #{chamfer_loss_brute_nosigma.1} parent=0 // loop_footer
    %s12 = sadd.s32 1, %s8
  $region7: #{chamfer_loss_brute_nosigma.1} parent=0 // loop_footer_branch
    %7 = sbr.rel target = $region3
  $region8: #{chamfer_loss_brute_nosigma.1} parent=0 // loop_exit
    _

</llo_original>
